<compile_context>
chip_gen: v7x
topology: tpu7x:2x2x1
jax: 0.10.0
libtpu: 0.0.40
codegen_flags: <defaults>
</compile_context>

<pallas_src>
import functools

import jax
import jax.numpy as jnp
from jax.experimental import pallas as pl
from jax.experimental.pallas import tpu as pltpu

# 48 MiB: large tiles on v5e/v6e (128 MiB physical VMEM), still safe headroom
# on v7x (64 MiB physical).
_VMEM_LIMIT = 48 * 1024 * 1024


def _round_up(x, m):
    return ((x + m - 1) // m) * m


def _pick_tile(dim, candidates):
    """Largest candidate evenly dividing dim; else the full dim (always legal:
    a block dim equal to the full array dim satisfies the (8,128) rule)."""
    for c in candidates:
        if c <= dim and dim % c == 0:
            return c
    return dim


def _row_block(m):
    """Row (M) tile; rows are zero-padded up to a multiple of this."""
    if m >= 1024:
        return 256          # full 256-row fill of the v6e/v7x MXU
    if m >= 128:
        return 128          # full fill on v5e, half fill on v6e/v7x
    return _round_up(m, 8)


# ------------------------------------------------------------ fused linear ---

def _make_linear_kernel_single_k(activation, fuse_ln, fuse_res):
    """K fits in one block: no accumulator; optional LN cached across N tiles."""

    def kernel(*refs):
        idx = 0
        x_ref = refs[idx]; idx += 1
        w_ref = refs[idx]; idx += 1
        b_ref = refs[idx]; idx += 1
        if fuse_ln:
            g_ref = refs[idx]; idx += 1
            beta_ref = refs[idx]; idx += 1
        if fuse_res:
            r_ref = refs[idx]; idx += 1
        o_ref = refs[idx]; idx += 1
        if fuse_ln:
            xln_ref = refs[idx]; idx += 1       # (tm, K) bf16 scratch

        if fuse_ln:
            # LayerNorm'd + bf16-cast activations are computed once per row
            # block (j == 0) and reused for every output tile j.
            @pl.when(pl.program_id(1) == 0)
            def _():
                x = x_ref[...].astype(jnp.float32)
                mean = jnp.mean(x, axis=-1, keepdims=True)
                var = jnp.mean(jnp.square(x - mean), axis=-1, keepdims=True)
                xln = (x - mean) * jax.lax.rsqrt(var + 1e-5) * g_ref[...] + beta_ref[...]
                xln_ref[...] = xln.astype(jnp.bfloat16)
            xb = xln_ref[...]
        else:
            xb = x_ref[...].astype(jnp.bfloat16)

        # bf16 MXU operands, f32 accumulation; write result directly (no
        # accumulator round-trip since K is not tiled).
        y = jnp.dot(xb, w_ref[...], preferred_element_type=jnp.float32) + b_ref[...]
        if activation == "quick_gelu":
            y = y * jax.nn.sigmoid(1.702 * y)       # OpenAI CLIP QuickGELU
        if fuse_res:
            y = y + r_ref[...].astype(jnp.float32)
        o_ref[...] = y.astype(o_ref.dtype)

    return kernel


def _make_linear_kernel_tiled_k(activation, fuse_res):
    """K tiled: f32 VMEM accumulator with pl.when init/finalize."""

    def kernel(*refs):
        idx = 0
        x_ref = refs[idx]; idx += 1
        w_ref = refs[idx]; idx += 1
        b_ref = refs[idx]; idx += 1
        if fuse_res:
            r_ref = refs[idx]; idx += 1
        o_ref = refs[idx]; idx += 1
        acc_ref = refs[idx]

        k = pl.program_id(2)

        @pl.when(k == 0)
        def _():
            acc_ref[...] = jnp.zeros_like(acc_ref)

        acc_ref[...] += jnp.dot(x_ref[...].astype(jnp.bfloat16), w_ref[...],
                                preferred_element_type=jnp.float32)

        @pl.when(k == pl.num_programs(2) - 1)
        def _():
            y = acc_ref[...] + b_ref[...]
            if activation == "quick_gelu":
                y = y * jax.nn.sigmoid(1.702 * y)
            if fuse_res:
                y = y + r_ref[...].astype(jnp.float32)
            o_ref[...] = y.astype(o_ref.dtype)

    return kernel


def linear(x, w, b, *, ln_g=None, ln_b=None, residual=None, activation=None,
           out_dtype=jnp.float32):
    """Fused (LayerNorm?) -> x @ w + b -> (QuickGELU?) -> (+residual?).

    x: (M, K) f32 or bf16;  w: (K, N) bf16, pre-transposed;  b: (1, N) f32;
    ln_g/ln_b: (1, K) f32;  residual: (M, N) f32.
    Rows are zero-padded to an MXU-friendly multiple and sliced back.
    """
    M, K = x.shape
    Kw, N = w.shape
    assert K == Kw, (K, Kw)
    fuse_ln = ln_g is not None
    fuse_res = residual is not None

    tm = _row_block(M)
    M_pad = _round_up(M, tm)
    tn = _pick_tile(N, (1024, 512, 256, 128))
    # LN needs the full feature axis in one block; otherwise tile K.
    tk = K if fuse_ln else _pick_tile(K, (1024, 512, 256, 128))
    single_k = (tk == K)

    if M_pad != M:
        x = jnp.pad(x, ((0, M_pad - M), (0, 0)))
        if fuse_res:
            residual = jnp.pad(residual, ((0, M_pad - M), (0, 0)))

    w = w.astype(jnp.bfloat16)

    if single_k:
        in_specs = [
            pl.BlockSpec((tm, K), lambda i, j: (i, 0)),
            pl.BlockSpec((K, tn), lambda i, j: (0, j)),
            pl.BlockSpec((1, tn), lambda i, j: (0, j)),
        ]
        operands = [x, w, b]
        scratch = []
        if fuse_ln:
            in_specs += [pl.BlockSpec((1, K), lambda i, j: (0, 0)),
                         pl.BlockSpec((1, K), lambda i, j: (0, 0))]
            operands += [ln_g, ln_b]
            scratch = [pltpu.VMEM((tm, K), jnp.bfloat16)]
        if fuse_res:
            in_specs += [pl.BlockSpec((tm, tn), lambda i, j: (i, j))]
            operands += [residual]

        out = pl.pallas_call(
            _make_linear_kernel_single_k(activation, fuse_ln, fuse_res),
            out_shape=jax.ShapeDtypeStruct((M_pad, N), out_dtype),
            grid=(M_pad // tm, N // tn),
            in_specs=in_specs,
            out_specs=pl.BlockSpec((tm, tn), lambda i, j: (i, j)),
            scratch_shapes=scratch,
            compiler_params=pltpu.CompilerParams(
                # With fused LN the N axis must stay in-order (j==0 fills the
                # LN cache), so it is "arbitrary"; rows shard across cores.
                dimension_semantics=("parallel",
                                     "arbitrary" if fuse_ln else "parallel"),
                vmem_limit_bytes=_VMEM_LIMIT),
        )(*operands)
    else:
        assert not fuse_ln
        in_specs = [
            pl.BlockSpec((tm, tk), lambda i, j, k: (i, k)),
            pl.BlockSpec((tk, tn), lambda i, j, k: (k, j)),
            pl.BlockSpec((1, tn), lambda i, j, k: (0, j)),
        ]
        operands = [x, w, b]
        if fuse_res:
            in_specs += [pl.BlockSpec((tm, tn), lambda i, j, k: (i, j))]
            operands += [residual]

        out = pl.pallas_call(
            _make_linear_kernel_tiled_k(activation, fuse_res),
            out_shape=jax.ShapeDtypeStruct((M_pad, N), out_dtype),
            grid=(M_pad // tm, N // tn, K // tk),
            in_specs=in_specs,
            out_specs=pl.BlockSpec((tm, tn), lambda i, j, k: (i, j)),
            scratch_shapes=[pltpu.VMEM((tm, tn), jnp.float32)],
            compiler_params=pltpu.CompilerParams(
                dimension_semantics=("parallel", "parallel", "arbitrary"),
                vmem_limit_bytes=_VMEM_LIMIT),
        )(*operands)

    return out[:M] if M_pad != M else out


# ----------------------------------------------------------------- layernorm -

def _layernorm_kernel(x_ref, g_ref, b_ref, o_ref):
    x = x_ref[...].astype(jnp.float32)
    mean = jnp.mean(x, axis=-1, keepdims=True)
    var = jnp.mean(jnp.square(x - mean), axis=-1, keepdims=True)
    o_ref[...] = ((x - mean) * jax.lax.rsqrt(var + 1e-5) * g_ref[...]
                  + b_ref[...]).astype(o_ref.dtype)


def layernorm(x, g, b, *, out_dtype=jnp.float32):
    """Standalone LayerNorm (only ln_pre, whose output is the residual stream).
    Memory-bound: use large (up to 512) row blocks; rows padded/sliced."""
    M, D = x.shape
    tm = 512 if M >= 512 else (128 if M >= 128 else _round_up(M, 8))
    M_pad = _round_up(M, tm)
    if M_pad != M:
        x = jnp.pad(x, ((0, M_pad - M), (0, 0)))
    out = pl.pallas_call(
        _layernorm_kernel,
        out_shape=jax.ShapeDtypeStruct((M_pad, D), out_dtype),
        grid=(M_pad // tm,),
        in_specs=[pl.BlockSpec((tm, D), lambda i: (i, 0)),
                  pl.BlockSpec((1, D), lambda i: (0, 0)),
                  pl.BlockSpec((1, D), lambda i: (0, 0))],
        out_specs=pl.BlockSpec((tm, D), lambda i: (i, 0)),
        compiler_params=pltpu.CompilerParams(
            dimension_semantics=("parallel",),
            vmem_limit_bytes=_VMEM_LIMIT),
    )(x, g, b)
    return out[:M] if M_pad != M else out


# ----------------------------------------------------------------- attention -

def _attn_kernel(qkv_ref, o_ref, o_scratch, *, heads, dh):
    """All heads of one batch element per grid step.

    qkv_ref: (S, 3*width) bf16 packed [q | k | v].  1/sqrt(dh) is already
    folded into the q columns of in_proj, so no score scaling here.
    Per-head outputs land in a VMEM (S, width) scratch at static lane offsets,
    followed by a single lane-dense HBM store.
    """
    width = heads * dh
    qkv = qkv_ref[...]
    for h in range(heads):                      # static unroll
        q = qkv[:, h * dh:(h + 1) * dh].astype(jnp.bfloat16)
        k = qkv[:, width + h * dh:width + (h + 1) * dh].astype(jnp.bfloat16)
        v = qkv[:, 2 * width + h * dh:2 * width + (h + 1) * dh].astype(jnp.bfloat16)
        # Contract the last dims of q and k directly: no k.T (XLU transpose);
        # the MXU handles RHS-transposed contraction natively.
        s = jax.lax.dot_general(q, k, (((1,), (1,)), ((), ())),
                                preferred_element_type=jnp.float32)
        s = s - jnp.max(s, axis=-1, keepdims=True)            # softmax in f32
        p = jnp.exp(s)
        # approx reciprocal on the EUP slot; ~1e-3 rel. error, fine for inference.
        p = p * pl.reciprocal(jnp.sum(p, axis=-1, keepdims=True), approx=True)
        o_scratch[:, h * dh:(h + 1) * dh] = jnp.dot(
            p.astype(jnp.bfloat16), v, preferred_element_type=jnp.float32)
    o_ref[...] = o_scratch[...].astype(o_ref.dtype)


def attention(qkv, *, heads, dh, out_dtype=jnp.bfloat16):
    """qkv: (B, S, 3*width) bf16 packed [q | k | v] -> (B, S, width)."""
    B, S, three_w = qkv.shape
    width = heads * dh
    # TODO(synk): on v7x (2 TensorCores) B should be >= 2 for full utilization;
    # a (B, heads) grid with lane-dense per-head DMA would add parallelism but
    # needs dh-wide blocks that violate the (8,128) block constraint.
    return pl.pallas_call(
        functools.partial(_attn_kernel, heads=heads, dh=dh),
        out_shape=jax.ShapeDtypeStruct((B, S, width), out_dtype),
        grid=(B,),
        in_specs=[pl.BlockSpec((pl.Squeezed(), S, three_w), lambda b: (b, 0, 0))],
        out_specs=pl.BlockSpec((pl.Squeezed(), S, width), lambda b: (b, 0, 0)),
        scratch_shapes=[pltpu.VMEM((S, width), jnp.float32)],
        compiler_params=pltpu.CompilerParams(
            dimension_semantics=("parallel",),
            vmem_limit_bytes=_VMEM_LIMIT),
    )(qkv)


# ------------------------------------------------------------ parameter init --

def init_params(key, *, width, layers, heads, patch, channels, grid, out_dim):
    """PyTorch-layout parameters (mirrors CLIP VisionTransformer's state dict)."""
    keys = iter(jax.random.split(key, 16 + 8 * layers))

    def nrm(shape, scale=0.02):
        return (scale * jax.random.normal(next(keys), shape)).astype(jnp.float32)

    params = {
        "conv1_w": nrm((width, channels, patch, patch)),     # Conv2d, bias=False
        "class_emb": nrm((width,)),
        "pos_emb": nrm((grid * grid + 1, width)),
        "ln_pre_g": jnp.ones((width,), jnp.float32),
        "ln_pre_b": jnp.zeros((width,), jnp.float32),
        "ln_post_g": jnp.ones((width,), jnp.float32),
        "ln_post_b": jnp.zeros((width,), jnp.float32),
        "proj": nrm((width, out_dim)),
        "blocks": [],
    }
    for _ in range(layers):
        params["blocks"].append({
            "ln1_g": jnp.ones((width,), jnp.float32),
            "ln1_b": jnp.zeros((width,), jnp.float32),
            "in_proj_w": nrm((3 * width, width)),            # nn.MultiheadAttention
            "in_proj_b": jnp.zeros((3 * width,), jnp.float32),
            "out_proj_w": nrm((width, width)),
            "out_proj_b": jnp.zeros((width,), jnp.float32),
            "ln2_g": jnp.ones((width,), jnp.float32),
            "ln2_b": jnp.zeros((width,), jnp.float32),
            "fc_w": nrm((4 * width, width)),                 # mlp.c_fc
            "fc_b": jnp.zeros((4 * width,), jnp.float32),
            "cproj_w": nrm((width, 4 * width)),              # mlp.c_proj
            "cproj_b": jnp.zeros((width,), jnp.float32),
        })
    return params


def prepare_params(p, *, heads):
    """One-time layout conversion: weights -> (K, N) bf16, biases/LN params ->
    (1, N)/(1, K) f32, attention scale folded into the q columns of in_proj,
    patch-embedding K padded to a 128 multiple.  No .T / reshape / scale HBM
    traffic in the forward pass."""
    width = p["conv1_w"].shape[0]
    out_dim = p["proj"].shape[1]
    dh = width // heads
    scale = dh ** -0.5
    qkv_col_scale = jnp.concatenate(
        [jnp.full((width,), scale, jnp.float32),
         jnp.ones((2 * width,), jnp.float32)])

    def row(v):
        return v.reshape(1, -1).astype(jnp.float32)

    pw = p["conv1_w"].reshape(width, -1).T.astype(jnp.float32)   # (C*p*p, width)
    k_patch = _round_up(pw.shape[0], 128)
    if k_patch != pw.shape[0]:
        pw = jnp.pad(pw, ((0, k_patch - pw.shape[0]), (0, 0)))

    prepped = {
        "patch_w": pw.astype(jnp.bfloat16),
        "patch_b": jnp.zeros((1, width), jnp.float32),
        "class_emb": p["class_emb"].astype(jnp.float32),
        "pos_emb": p["pos_emb"].astype(jnp.float32),
        "ln_pre_g": row(p["ln_pre_g"]), "ln_pre_b": row(p["ln_pre_b"]),
        "ln_post_g": row(p["ln_post_g"]), "ln_post_b": row(p["ln_post_b"]),
        "proj_w": p["proj"].astype(jnp.bfloat16),
        "proj_b": jnp.zeros((1, out_dim), jnp.float32),
        "blocks": [],
    }
    for blk in p["blocks"]:
        prepped["blocks"].append({
            "ln1_g": row(blk["ln1_g"]), "ln1_b": row(blk["ln1_b"]),
            "in_proj_w": (blk["in_proj_w"].T * qkv_col_scale[None, :]
                          ).astype(jnp.bfloat16),
            "in_proj_b": (blk["in_proj_b"] * qkv_col_scale
                          ).reshape(1, -1).astype(jnp.float32),
            "out_proj_w": blk["out_proj_w"].T.astype(jnp.bfloat16),
            "out_proj_b": row(blk["out_proj_b"]),
            "ln2_g": row(blk["ln2_g"]), "ln2_b": row(blk["ln2_b"]),
            "fc_w": blk["fc_w"].T.astype(jnp.bfloat16),
            "fc_b": row(blk["fc_b"]),
            "cproj_w": blk["cproj_w"].T.astype(jnp.bfloat16),
            "cproj_b": row(blk["cproj_b"]),
        })
    return prepped


# ---------------------------------------------------------------- forward -----

def encode_image(params, image, *, patch, heads):
    """CLIP VisionTransformer.encode_image. image: (B, C, H, W) NCHW."""
    B, C, H, W_img = image.shape
    gh, gw = H // patch, W_img // patch
    width = params["patch_w"].shape[1]
    k_patch = params["patch_w"].shape[0]          # padded C*p*p
    dh = width // heads

    # conv1 (kernel=stride=patch, bias=False) lowered to a patch matmul; the
    # contraction dim is zero-padded to a 128 multiple to match patch_w.
    x = image.reshape(B, C, gh, patch, gw, patch)
    x = x.transpose(0, 2, 4, 1, 3, 5).reshape(B * gh * gw, C * patch * patch)
    if x.shape[1] != k_patch:
        x = jnp.pad(x, ((0, 0), (0, k_patch - x.shape[1])))
    x = linear(x, params["patch_w"], params["patch_b"])            # (B*gh*gw, width)
    x = x.reshape(B, gh * gw, width)

    # class token + positional embedding (cheap XLA glue).
    cls = jnp.broadcast_to(params["class_emb"].reshape(1, 1, width), (B, 1, width))
    x = jnp.concatenate([cls, x], axis=1) + params["pos_emb"][None]
    S = x.shape[1]
    M = B * S

    # ln_pre (f32 residual stream).
    x2 = layernorm(x.reshape(M, width), params["ln_pre_g"], params["ln_pre_b"])

    # transformer: 5 fused pallas_calls per ResidualAttentionBlock.
    # Large intermediates (qkv, attention out, MLP hidden) live in bf16.
    for blk in params["blocks"]:
        qkv = linear(x2, blk["in_proj_w"], blk["in_proj_b"],
                     ln_g=blk["ln1_g"], ln_b=blk["ln1_b"],
                     out_dtype=jnp.bfloat16)                        # LN1 fused
        o = attention(qkv.reshape(B, S, 3 * width), heads=heads, dh=dh)
        x2 = linear(o.reshape(M, width), blk["out_proj_w"], blk["out_proj_b"],
                    residual=x2, out_dtype=jnp.float32)             # residual fused
        h = linear(x2, blk["fc_w"], blk["fc_b"],
                   ln_g=blk["ln2_g"], ln_b=blk["ln2_b"],
                   activation="quick_gelu", out_dtype=jnp.bfloat16) # LN2+GELU fused
        x2 = linear(h, blk["cproj_w"], blk["cproj_b"],
                    residual=x2, out_dtype=jnp.float32)             # residual fused

    # ln_post + projection on the class token, fused into one call.
    cls_tok = x2.reshape(B, S, width)[:, 0, :]
    return linear(cls_tok, params["proj_w"], params["proj_b"],
                  ln_g=params["ln_post_g"], ln_b=params["ln_post_b"])   # (B, out_dim)


# -------------------------------------------------------------------- main ----

if __name__ == "__main__":
    # Small, CLIP-consistent config.
    B, C, IMG, PATCH = 2, 3, 16, 8
    WIDTH, HEADS, LAYERS, OUT_DIM = 32, 4, 2, 16
    GRID = IMG // PATCH

    key = jax.random.PRNGKey(0)
    k_img, k_par, k_a, k_b = jax.random.split(key, 4)
    image = jax.random.normal(k_img, (B, C, IMG, IMG), dtype=jnp.float32)

    raw_params = init_params(k_par, width=WIDTH, layers=LAYERS, heads=HEADS,
                             patch=PATCH, channels=C, grid=GRID, out_dim=OUT_DIM)
    params = prepare_params(raw_params, heads=HEADS)

    fwd = jax.jit(functools.partial(encode_image, patch=PATCH, heads=HEADS))
    feats = jax.block_until_ready(fwd(params, image))
    assert feats.shape == (B, OUT_DIM), feats.shape
    assert bool(jnp.all(jnp.isfinite(feats)))

    # Smoke-test the K-tiled (accumulator) matmul path, unused at toy widths
    # but used for mlp.c_proj (K = 4*width) at real CLIP sizes.
    xa = jax.random.normal(k_a, (16, 2048), dtype=jnp.float32)
    wb = jax.random.normal(k_b, (2048, 128), dtype=jnp.float32)
    out = jax.block_until_ready(
        linear(xa, wb.astype(jnp.bfloat16), jnp.zeros((1, 128), jnp.float32)))
    ref = xa @ wb
    err = float(jnp.max(jnp.abs(out - ref)) / (float(jnp.max(jnp.abs(ref))) + 1.0))
    assert err < 0.1, err

    print("KERNEL_OK")
</pallas_src>

<mosaic_0001>
module attributes {stable_mosaic.version = 11 : i64} {
  func.func @kernel(%arg0: i32, %arg1: i32, %arg2: memref<8x256xf32, #tpu.memory_space<vmem>>, %arg3: memref<256x32xbf16, #tpu.memory_space<vmem>>, %arg4: memref<1x32xf32, #tpu.memory_space<vmem>>, %arg5: memref<8x32xf32, #tpu.memory_space<vmem>>) attributes {dimension_semantics = [#tpu.dimension_semantics<parallel>, #tpu.dimension_semantics<parallel>], iteration_bounds = array<i64: 1, 1>, scalar_prefetch = 0 : i64, scratch_operands = 0 : i64, tpu.core_type = #tpu.core_type<tc>, window_params = [{transform_indices = @transform_0, window_bounds = array<i64: 8, 256>}, {transform_indices = @transform_1, window_bounds = array<i64: 256, 32>}, {transform_indices = @transform_2, window_bounds = array<i64: 1, 32>}, {transform_indices = @transform_3, window_bounds = array<i64: 8, 32>}]} {
    %c0 = arith.constant 0 : index
    %c0_0 = arith.constant 0 : index
    %0 = vector.load %arg2[%c0, %c0_0] : memref<8x256xf32, #tpu.memory_space<vmem>>, vector<8x256xf32>
    %1 = arith.truncf %0 : vector<8x256xf32> to vector<8x256xbf16>
    %c0_1 = arith.constant 0 : index
    %c0_2 = arith.constant 0 : index
    %2 = vector.load %arg3[%c0_1, %c0_2] : memref<256x32xbf16, #tpu.memory_space<vmem>>, vector<256x32xbf16>
    %cst = arith.constant dense<0.000000e+00> : vector<8x32xf32>
    %3 = tpu.matmul %1, %2, %cst {dimension_numbers = #tpu.dot_dimension_numbers<[1], [0], [0], [1], [0, 0, 1, 1], [], []>} : vector<8x256xbf16>, vector<256x32xbf16>, vector<8x32xf32> -> vector<8x32xf32>
    %c0_3 = arith.constant 0 : index
    %c0_4 = arith.constant 0 : index
    %4 = vector.load %arg4[%c0_3, %c0_4] : memref<1x32xf32, #tpu.memory_space<vmem>>, vector<1x32xf32>
    %5 = vector.broadcast %4 : vector<1x32xf32> to vector<8x32xf32>
    %6 = arith.addf %3, %5 : vector<8x32xf32>
    %c0_5 = arith.constant 0 : index
    %c0_6 = arith.constant 0 : index
    %7 = vector.load %arg5[%c0_5, %c0_6] : memref<8x32xf32, #tpu.memory_space<vmem>>, vector<8x32xf32>
    tpu.vector_store %arg5[%c0_5, %c0_6], %6 {strides = array<i32>} : memref<8x32xf32, #tpu.memory_space<vmem>>, vector<8x32xf32>,
    return
  }
  func.func @transform_0(%arg0: i32, %arg1: i32) -> (i32, i32) {
    %c0_i32 = arith.constant 0 : i32
    %c0_i32_0 = arith.constant 0 : i32
    return %arg0, %c0_i32 : i32, i32
  }
  func.func @transform_1(%arg0: i32, %arg1: i32) -> (i32, i32) {
    %c0_i32 = arith.constant 0 : i32
    %c0_i32_0 = arith.constant 0 : i32
    return %c0_i32, %arg1 : i32, i32
  }
  func.func @transform_2(%arg0: i32, %arg1: i32) -> (i32, i32) {
    %c0_i32 = arith.constant 0 : i32
    %c0_i32_0 = arith.constant 0 : i32
    return %c0_i32, %arg1 : i32, i32
  }
  func.func @transform_3(%arg0: i32, %arg1: i32) -> (i32, i32) {
    %c0_i32 = arith.constant 0 : i32
    return %arg0, %arg1 : i32, i32
  }
}

module attributes {stable_mosaic.version = 11 : i64} {
  func.func @_layernorm_kernel(%arg0: i32, %arg1: memref<16x32xf32, #tpu.memory_space<vmem>>, %arg2: memref<1x32xf32, #tpu.memory_space<vmem>>, %arg3: memref<1x32xf32, #tpu.memory_space<vmem>>, %arg4: memref<16x32xf32, #tpu.memory_space<vmem>>) attributes {dimension_semantics = [#tpu.dimension_semantics<parallel>], iteration_bounds = array<i64: 1>, scalar_prefetch = 0 : i64, scratch_operands = 0 : i64, tpu.core_type = #tpu.core_type<tc>, window_params = [{transform_indices = @transform_0, window_bounds = array<i64: 16, 32>}, {pipeline_mode = #tpu.pipeline_mode<synchronous>, transform_indices = @transform_1, window_bounds = array<i64: 1, 32>}, {pipeline_mode = #tpu.pipeline_mode<synchronous>, transform_indices = @transform_2, window_bounds = array<i64: 1, 32>}, {transform_indices = @transform_3, window_bounds = array<i64: 16, 32>}]} {
    %c0 = arith.constant 0 : index
    %c0_0 = arith.constant 0 : index
    %0 = vector.load %arg1[%c0, %c0_0] : memref<16x32xf32, #tpu.memory_space<vmem>>, vector<16x32xf32>
    %cst = arith.constant dense<0.000000e+00> : vector<16xf32>
    %1 = vector.multi_reduction <add>, %0, %cst [1] : vector<16x32xf32> to vector<16xf32>
    %2 = vector.shape_cast %1 : vector<16xf32> to vector<16x1xf32>
    %cst_1 = arith.constant 3.200000e+01 : f32
    %3 = vector.broadcast %cst_1 : f32 to vector<16x1xf32>
    %4 = arith.divf %2, %3 : vector<16x1xf32>
    %5 = vector.broadcast %4 : vector<16x1xf32> to vector<16x32xf32>
    %6 = arith.subf %0, %5 : vector<16x32xf32>
    %7 = arith.mulf %6, %6 : vector<16x32xf32>
    %cst_2 = arith.constant dense<0.000000e+00> : vector<16xf32>
    %8 = vector.multi_reduction <add>, %7, %cst_2 [1] : vector<16x32xf32> to vector<16xf32>
    %9 = vector.shape_cast %8 : vector<16xf32> to vector<16x1xf32>
    %cst_3 = arith.constant 3.200000e+01 : f32
    %10 = vector.broadcast %cst_3 : f32 to vector<16x1xf32>
    %11 = arith.divf %9, %10 : vector<16x1xf32>
    %12 = vector.broadcast %4 : vector<16x1xf32> to vector<16x32xf32>
    %13 = arith.subf %0, %12 : vector<16x32xf32>
    %cst_4 = arith.constant 9.99999974E-6 : f32
    %14 = vector.broadcast %cst_4 : f32 to vector<16x1xf32>
    %15 = arith.addf %11, %14 : vector<16x1xf32>
    %16 = math.rsqrt %15 : vector<16x1xf32>
    %17 = vector.broadcast %16 : vector<16x1xf32> to vector<16x32xf32>
    %18 = arith.mulf %13, %17 : vector<16x32xf32>
    %c0_5 = arith.constant 0 : index
    %c0_6 = arith.constant 0 : index
    %19 = vector.load %arg2[%c0_5, %c0_6] : memref<1x32xf32, #tpu.memory_space<vmem>>, vector<1x32xf32>
    %20 = vector.broadcast %19 : vector<1x32xf32> to vector<16x32xf32>
    %21 = arith.mulf %18, %20 : vector<16x32xf32>
    %c0_7 = arith.constant 0 : index
    %c0_8 = arith.constant 0 : index
    %22 = vector.load %arg3[%c0_7, %c0_8] : memref<1x32xf32, #tpu.memory_space<vmem>>, vector<1x32xf32>
    %23 = vector.broadcast %22 : vector<1x32xf32> to vector<16x32xf32>
    %24 = arith.addf %21, %23 : vector<16x32xf32>
    %c0_9 = arith.constant 0 : index
    %c0_10 = arith.constant 0 : index
    %25 = vector.load %arg4[%c0_9, %c0_10] : memref<16x32xf32, #tpu.memory_space<vmem>>, vector<16x32xf32>
    tpu.vector_store %arg4[%c0_9, %c0_10], %24 {strides = array<i32>} : memref<16x32xf32, #tpu.memory_space<vmem>>, vector<16x32xf32>,
    return
  }
  func.func @transform_0(%arg0: i32) -> (i32, i32) {
    %c0_i32 = arith.constant 0 : i32
    %c0_i32_0 = arith.constant 0 : i32
    return %arg0, %c0_i32 : i32, i32
  }
  func.func @transform_1(%arg0: i32) -> (i32, i32) {
    %c0_i32 = arith.constant 0 : i32
    %c0_i32_0 = arith.constant 0 : i32
    %c0_i32_1 = arith.constant 0 : i32
    return %c0_i32, %c0_i32_0 : i32, i32
  }
  func.func @transform_2(%arg0: i32) -> (i32, i32) {
    %c0_i32 = arith.constant 0 : i32
    %c0_i32_0 = arith.constant 0 : i32
    %c0_i32_1 = arith.constant 0 : i32
    return %c0_i32, %c0_i32_0 : i32, i32
  }
  func.func @transform_3(%arg0: i32) -> (i32, i32) {
    %c0_i32 = arith.constant 0 : i32
    %c0_i32_0 = arith.constant 0 : i32
    return %arg0, %c0_i32 : i32, i32
  }
}

module attributes {stable_mosaic.version = 11 : i64} {
  func.func @kernel(%arg0: i32, %arg1: i32, %arg2: memref<16x32xf32, #tpu.memory_space<vmem>>, %arg3: memref<32x96xbf16, #tpu.memory_space<vmem>>, %arg4: memref<1x96xf32, #tpu.memory_space<vmem>>, %arg5: memref<1x32xf32, #tpu.memory_space<vmem>>, %arg6: memref<1x32xf32, #tpu.memory_space<vmem>>, %arg7: memref<16x96xbf16, #tpu.memory_space<vmem>>, %arg8: memref<16x32xbf16, #tpu.memory_space<vmem>>) attributes {dimension_semantics = [#tpu.dimension_semantics<parallel>, #tpu.dimension_semantics<arbitrary>], iteration_bounds = array<i64: 1, 1>, scalar_prefetch = 0 : i64, scratch_operands = 1 : i64, tpu.core_type = #tpu.core_type<tc>, window_params = [{transform_indices = @transform_0, window_bounds = array<i64: 16, 32>}, {transform_indices = @transform_1, window_bounds = array<i64: 32, 96>}, {transform_indices = @transform_2, window_bounds = array<i64: 1, 96>}, {pipeline_mode = #tpu.pipeline_mode<synchronous>, transform_indices = @transform_3, window_bounds = array<i64: 1, 32>}, {pipeline_mode = #tpu.pipeline_mode<synchronous>, transform_indices = @transform_4, window_bounds = array<i64: 1, 32>}, {transform_indices = @transform_5, window_bounds = array<i64: 16, 96>}]} {
    %c0_i32 = arith.constant 0 : i32
    %0 = arith.cmpi eq, %arg1, %c0_i32 : i32
    %1 = arith.extui %0 : i1 to i32
    %c0_i32_0 = arith.constant 0 : i32
    %2 = arith.cmpi ne, %1, %c0_i32_0 : i32
    scf.if %2 {
      %c0_8 = arith.constant 0 : index
      %c0_9 = arith.constant 0 : index
      %11 = vector.load %arg2[%c0_8, %c0_9] : memref<16x32xf32, #tpu.memory_space<vmem>>, vector<16x32xf32>
      %cst_10 = arith.constant dense<0.000000e+00> : vector<16xf32>
      %12 = vector.multi_reduction <add>, %11, %cst_10 [1] : vector<16x32xf32> to vector<16xf32>
      %13 = vector.shape_cast %12 : vector<16xf32> to vector<16x1xf32>
      %cst_11 = arith.constant 3.200000e+01 : f32
      %14 = vector.broadcast %cst_11 : f32 to vector<16x1xf32>
      %15 = arith.divf %13, %14 : vector<16x1xf32>
      %16 = vector.broadcast %15 : vector<16x1xf32> to vector<16x32xf32>
      %17 = arith.subf %11, %16 : vector<16x32xf32>
      %18 = arith.mulf %17, %17 : vector<16x32xf32>
      %cst_12 = arith.constant dense<0.000000e+00> : vector<16xf32>
      %19 = vector.multi_reduction <add>, %18, %cst_12 [1] : vector<16x32xf32> to vector<16xf32>
      %20 = vector.shape_cast %19 : vector<16xf32> to vector<16x1xf32>
      %cst_13 = arith.constant 3.200000e+01 : f32
      %21 = vector.broadcast %cst_13 : f32 to vector<16x1xf32>
      %22 = arith.divf %20, %21 : vector<16x1xf32>
      %23 = vector.broadcast %15 : vector<16x1xf32> to vector<16x32xf32>
      %24 = arith.subf %11, %23 : vector<16x32xf32>
      %cst_14 = arith.constant 9.99999974E-6 : f32
      %25 = vector.broadcast %cst_14 : f32 to vector<16x1xf32>
      %26 = arith.addf %22, %25 : vector<16x1xf32>
      %27 = math.rsqrt %26 : vector<16x1xf32>
      %28 = vector.broadcast %27 : vector<16x1xf32> to vector<16x32xf32>
      %29 = arith.mulf %24, %28 : vector<16x32xf32>
      %c0_15 = arith.constant 0 : index
      %c0_16 = arith.constant 0 : index
      %30 = vector.load %arg5[%c0_15, %c0_16] : memref<1x32xf32, #tpu.memory_space<vmem>>, vector<1x32xf32>
      %31 = vector.broadcast %30 : vector<1x32xf32> to vector<16x32xf32>
      %32 = arith.mulf %29, %31 : vector<16x32xf32>
      %c0_17 = arith.constant 0 : index
      %c0_18 = arith.constant 0 : index
      %33 = vector.load %arg6[%c0_17, %c0_18] : memref<1x32xf32, #tpu.memory_space<vmem>>, vector<1x32xf32>
      %34 = vector.broadcast %33 : vector<1x32xf32> to vector<16x32xf32>
      %35 = arith.addf %32, %34 : vector<16x32xf32>
      %36 = arith.truncf %35 : vector<16x32xf32> to vector<16x32xbf16>
      %c0_19 = arith.constant 0 : index
      %c0_20 = arith.constant 0 : index
      %37 = vector.load %arg8[%c0_19, %c0_20] : memref<16x32xbf16, #tpu.memory_space<vmem>>, vector<16x32xbf16>
      tpu.vector_store %arg8[%c0_19, %c0_20], %36 {strides = array<i32>} : memref<16x32xbf16, #tpu.memory_space<vmem>>, vector<16x32xbf16>,
    } else {
    }
    %c0 = arith.constant 0 : index
    %c0_1 = arith.constant 0 : index
    %3 = vector.load %arg8[%c0, %c0_1] : memref<16x32xbf16, #tpu.memory_space<vmem>>, vector<16x32xbf16>
    %c0_2 = arith.constant 0 : index
    %c0_3 = arith.constant 0 : index
    %4 = vector.load %arg3[%c0_2, %c0_3] : memref<32x96xbf16, #tpu.memory_space<vmem>>, vector<32x96xbf16>
    %cst = arith.constant dense<0.000000e+00> : vector<16x96xf32>
    %5 = tpu.matmul %3, %4, %cst {dimension_numbers = #tpu.dot_dimension_numbers<[1], [0], [0], [1], [0, 0, 1, 1], [], []>} : vector<16x32xbf16>, vector<32x96xbf16>, vector<16x96xf32> -> vector<16x96xf32>
    %c0_4 = arith.constant 0 : index
    %c0_5 = arith.constant 0 : index
    %6 = vector.load %arg4[%c0_4, %c0_5] : memref<1x96xf32, #tpu.memory_space<vmem>>, vector<1x96xf32>
    %7 = vector.broadcast %6 : vector<1x96xf32> to vector<16x96xf32>
    %8 = arith.addf %5, %7 : vector<16x96xf32>
    %9 = arith.truncf %8 : vector<16x96xf32> to vector<16x96xbf16>
    %c0_6 = arith.constant 0 : index
    %c0_7 = arith.constant 0 : index
    %10 = vector.load %arg7[%c0_6, %c0_7] : memref<16x96xbf16, #tpu.memory_space<vmem>>, vector<16x96xbf16>
    tpu.vector_store %arg7[%c0_6, %c0_7], %9 {strides = array<i32>} : memref<16x96xbf16, #tpu.memory_space<vmem>>, vector<16x96xbf16>,
    return
  }
  func.func @transform_0(%arg0: i32, %arg1: i32) -> (i32, i32) {
    %c0_i32 = arith.constant 0 : i32
    %c0_i32_0 = arith.constant 0 : i32
    return %arg0, %c0_i32 : i32, i32
  }
  func.func @transform_1(%arg0: i32, %arg1: i32) -> (i32, i32) {
    %c0_i32 = arith.constant 0 : i32
    %c0_i32_0 = arith.constant 0 : i32
    return %c0_i32, %arg1 : i32, i32
  }
  func.func @transform_2(%arg0: i32, %arg1: i32) -> (i32, i32) {
    %c0_i32 = arith.constant 0 : i32
    %c0_i32_0 = arith.constant 0 : i32
    return %c0_i32, %arg1 : i32, i32
  }
  func.func @transform_3(%arg0: i32, %arg1: i32) -> (i32, i32) {
    %c0_i32 = arith.constant 0 : i32
    %c0_i32_0 = arith.constant 0 : i32
    %c0_i32_1 = arith.constant 0 : i32
    return %c0_i32, %c0_i32_0 : i32, i32
  }
  func.func @transform_4(%arg0: i32, %arg1: i32) -> (i32, i32) {
    %c0_i32 = arith.constant 0 : i32
    %c0_i32_0 = arith.constant 0 : i32
    %c0_i32_1 = arith.constant 0 : i32
    return %c0_i32, %c0_i32_0 : i32, i32
  }
  func.func @transform_5(%arg0: i32, %arg1: i32) -> (i32, i32) {
    %c0_i32 = arith.constant 0 : i32
    return %arg0, %arg1 : i32, i32
  }
}

module attributes {stable_mosaic.version = 11 : i64} {
  func.func @_attn_kernel(%arg0: i32, %arg1: memref<1x5x96xbf16, #tpu.memory_space<vmem>>, %arg2: memref<1x5x32xbf16, #tpu.memory_space<vmem>>, %arg3: memref<5x32xf32, #tpu.memory_space<vmem>>) attributes {dimension_semantics = [#tpu.dimension_semantics<parallel>], iteration_bounds = array<i64: 2>, scalar_prefetch = 0 : i64, scratch_operands = 1 : i64, tpu.core_type = #tpu.core_type<tc>, window_params = [{transform_indices = @transform_0, window_bounds = array<i64: 1, 5, 96>}, {transform_indices = @transform_1, window_bounds = array<i64: 1, 5, 32>}]} {
    %c0 = arith.constant 0 : index
    %c0_0 = arith.constant 0 : index
    %c0_1 = arith.constant 0 : index
    %0 = vector.load %arg1[%c0, %c0_0, %c0_1] : memref<1x5x96xbf16, #tpu.memory_space<vmem>>, vector<1x5x96xbf16>
    %1 = vector.shape_cast %0 : vector<1x5x96xbf16> to vector<5x96xbf16>
    %2 = vector.extract_strided_slice %1 {offsets = [0, 0], sizes = [5, 8], strides = [1, 1]} : vector<5x96xbf16> to vector<5x8xbf16>
    %3 = vector.extract_strided_slice %1 {offsets = [0, 32], sizes = [5, 8], strides = [1, 1]} : vector<5x96xbf16> to vector<5x8xbf16>
    %4 = vector.extract_strided_slice %1 {offsets = [0, 64], sizes = [5, 8], strides = [1, 1]} : vector<5x96xbf16> to vector<5x8xbf16>
    %cst = arith.constant dense<0.000000e+00> : vector<5x5xf32>
    %5 = tpu.matmul %2, %3, %cst {dimension_numbers = #tpu.dot_dimension_numbers<[1], [1], [0], [0], [0, 0, 1, 0], [], []>} : vector<5x8xbf16>, vector<5x8xbf16>, vector<5x5xf32> -> vector<5x5xf32>
    %cst_2 = arith.constant dense<0xFF800000> : vector<5xf32>
    %6 = vector.multi_reduction <maximumf>, %5, %cst_2 [1] : vector<5x5xf32> to vector<5xf32>
    %7 = vector.shape_cast %6 : vector<5xf32> to vector<5x1xf32>
    %8 = vector.broadcast %7 : vector<5x1xf32> to vector<5x5xf32>
    %9 = arith.subf %5, %8 : vector<5x5xf32>
    %10 = math.exp %9 : vector<5x5xf32>
    %cst_3 = arith.constant dense<0.000000e+00> : vector<5xf32>
    %11 = vector.multi_reduction <add>, %10, %cst_3 [1] : vector<5x5xf32> to vector<5xf32>
    %12 = vector.shape_cast %11 : vector<5xf32> to vector<5x1xf32>
    %13 = tpu.reciprocal %12 {approx = true} : vector<5x1xf32> -> vector<5x1xf32>
    %14 = vector.broadcast %13 : vector<5x1xf32> to vector<5x5xf32>
    %15 = arith.mulf %10, %14 : vector<5x5xf32>
    %16 = arith.truncf %15 : vector<5x5xf32> to vector<5x5xbf16>
    %cst_4 = arith.constant dense<0.000000e+00> : vector<5x8xf32>
    %17 = tpu.matmul %16, %4, %cst_4 {dimension_numbers = #tpu.dot_dimension_numbers<[1], [0], [0], [1], [0, 0, 1, 1], [], []>} : vector<5x5xbf16>, vector<5x8xbf16>, vector<5x8xf32> -> vector<5x8xf32>
    %c0_5 = arith.constant 0 : index
    %c0_6 = arith.constant 0 : index
    %18 = vector.load %arg3[%c0_5, %c0_6] : memref<5x32xf32, #tpu.memory_space<vmem>>, vector<5x8xf32>
    tpu.vector_store %arg3[%c0_5, %c0_6], %17 {strides = array<i32>} : memref<5x32xf32, #tpu.memory_space<vmem>>, vector<5x8xf32>,
    %19 = vector.extract_strided_slice %1 {offsets = [0, 8], sizes = [5, 8], strides = [1, 1]} : vector<5x96xbf16> to vector<5x8xbf16>
    %20 = vector.extract_strided_slice %1 {offsets = [0, 40], sizes = [5, 8], strides = [1, 1]} : vector<5x96xbf16> to vector<5x8xbf16>
    %21 = vector.extract_strided_slice %1 {offsets = [0, 72], sizes = [5, 8], strides = [1, 1]} : vector<5x96xbf16> to vector<5x8xbf16>
    %cst_7 = arith.constant dense<0.000000e+00> : vector<5x5xf32>
    %22 = tpu.matmul %19, %20, %cst_7 {dimension_numbers = #tpu.dot_dimension_numbers<[1], [1], [0], [0], [0, 0, 1, 0], [], []>} : vector<5x8xbf16>, vector<5x8xbf16>, vector<5x5xf32> -> vector<5x5xf32>
    %cst_8 = arith.constant dense<0xFF800000> : vector<5xf32>
    %23 = vector.multi_reduction <maximumf>, %22, %cst_8 [1] : vector<5x5xf32> to vector<5xf32>
    %24 = vector.shape_cast %23 : vector<5xf32> to vector<5x1xf32>
    %25 = vector.broadcast %24 : vector<5x1xf32> to vector<5x5xf32>
    %26 = arith.subf %22, %25 : vector<5x5xf32>
    %27 = math.exp %26 : vector<5x5xf32>
    %cst_9 = arith.constant dense<0.000000e+00> : vector<5xf32>
    %28 = vector.multi_reduction <add>, %27, %cst_9 [1] : vector<5x5xf32> to vector<5xf32>
    %29 = vector.shape_cast %28 : vector<5xf32> to vector<5x1xf32>
    %30 = tpu.reciprocal %29 {approx = true} : vector<5x1xf32> -> vector<5x1xf32>
    %31 = vector.broadcast %30 : vector<5x1xf32> to vector<5x5xf32>
    %32 = arith.mulf %27, %31 : vector<5x5xf32>
    %33 = arith.truncf %32 : vector<5x5xf32> to vector<5x5xbf16>
    %cst_10 = arith.constant dense<0.000000e+00> : vector<5x8xf32>
    %34 = tpu.matmul %33, %21, %cst_10 {dimension_numbers = #tpu.dot_dimension_numbers<[1], [0], [0], [1], [0, 0, 1, 1], [], []>} : vector<5x5xbf16>, vector<5x8xbf16>, vector<5x8xf32> -> vector<5x8xf32>
    %c0_11 = arith.constant 0 : index
    %c8 = arith.constant 8 : index
    %35 = vector.load %arg3[%c0_11, %c8] : memref<5x32xf32, #tpu.memory_space<vmem>>, vector<5x8xf32>
    tpu.vector_store %arg3[%c0_11, %c8], %34 {strides = array<i32>} : memref<5x32xf32, #tpu.memory_space<vmem>>, vector<5x8xf32>,
    %36 = vector.extract_strided_slice %1 {offsets = [0, 16], sizes = [5, 8], strides = [1, 1]} : vector<5x96xbf16> to vector<5x8xbf16>
    %37 = vector.extract_strided_slice %1 {offsets = [0, 48], sizes = [5, 8], strides = [1, 1]} : vector<5x96xbf16> to vector<5x8xbf16>
    %38 = vector.extract_strided_slice %1 {offsets = [0, 80], sizes = [5, 8], strides = [1, 1]} : vector<5x96xbf16> to vector<5x8xbf16>
    %cst_12 = arith.constant dense<0.000000e+00> : vector<5x5xf32>
    %39 = tpu.matmul %36, %37, %cst_12 {dimension_numbers = #tpu.dot_dimension_numbers<[1], [1], [0], [0], [0, 0, 1, 0], [], []>} : vector<5x8xbf16>, vector<5x8xbf16>, vector<5x5xf32> -> vector<5x5xf32>
    %cst_13 = arith.constant dense<0xFF800000> : vector<5xf32>
    %40 = vector.multi_reduction <maximumf>, %39, %cst_13 [1] : vector<5x5xf32> to vector<5xf32>
    %41 = vector.shape_cast %40 : vector<5xf32> to vector<5x1xf32>
    %42 = vector.broadcast %41 : vector<5x1xf32> to vector<5x5xf32>
    %43 = arith.subf %39, %42 : vector<5x5xf32>
    %44 = math.exp %43 : vector<5x5xf32>
    %cst_14 = arith.constant dense<0.000000e+00> : vector<5xf32>
    %45 = vector.multi_reduction <add>, %44, %cst_14 [1] : vector<5x5xf32> to vector<5xf32>
    %46 = vector.shape_cast %45 : vector<5xf32> to vector<5x1xf32>
    %47 = tpu.reciprocal %46 {approx = true} : vector<5x1xf32> -> vector<5x1xf32>
    %48 = vector.broadcast %47 : vector<5x1xf32> to vector<5x5xf32>
    %49 = arith.mulf %44, %48 : vector<5x5xf32>
    %50 = arith.truncf %49 : vector<5x5xf32> to vector<5x5xbf16>
    %cst_15 = arith.constant dense<0.000000e+00> : vector<5x8xf32>
    %51 = tpu.matmul %50, %38, %cst_15 {dimension_numbers = #tpu.dot_dimension_numbers<[1], [0], [0], [1], [0, 0, 1, 1], [], []>} : vector<5x5xbf16>, vector<5x8xbf16>, vector<5x8xf32> -> vector<5x8xf32>
    %c0_16 = arith.constant 0 : index
    %c16 = arith.constant 16 : index
    %52 = vector.load %arg3[%c0_16, %c16] : memref<5x32xf32, #tpu.memory_space<vmem>>, vector<5x8xf32>
    tpu.vector_store %arg3[%c0_16, %c16], %51 {strides = array<i32>} : memref<5x32xf32, #tpu.memory_space<vmem>>, vector<5x8xf32>,
    %53 = vector.extract_strided_slice %1 {offsets = [0, 24], sizes = [5, 8], strides = [1, 1]} : vector<5x96xbf16> to vector<5x8xbf16>
    %54 = vector.extract_strided_slice %1 {offsets = [0, 56], sizes = [5, 8], strides = [1, 1]} : vector<5x96xbf16> to vector<5x8xbf16>
    %55 = vector.extract_strided_slice %1 {offsets = [0, 88], sizes = [5, 8], strides = [1, 1]} : vector<5x96xbf16> to vector<5x8xbf16>
    %cst_17 = arith.constant dense<0.000000e+00> : vector<5x5xf32>
    %56 = tpu.matmul %53, %54, %cst_17 {dimension_numbers = #tpu.dot_dimension_numbers<[1], [1], [0], [0], [0, 0, 1, 0], [], []>} : vector<5x8xbf16>, vector<5x8xbf16>, vector<5x5xf32> -> vector<5x5xf32>
    %cst_18 = arith.constant dense<0xFF800000> : vector<5xf32>
    %57 = vector.multi_reduction <maximumf>, %56, %cst_18 [1] : vector<5x5xf32> to vector<5xf32>
    %58 = vector.shape_cast %57 : vector<5xf32> to vector<5x1xf32>
    %59 = vector.broadcast %58 : vector<5x1xf32> to vector<5x5xf32>
    %60 = arith.subf %56, %59 : vector<5x5xf32>
    %61 = math.exp %60 : vector<5x5xf32>
    %cst_19 = arith.constant dense<0.000000e+00> : vector<5xf32>
    %62 = vector.multi_reduction <add>, %61, %cst_19 [1] : vector<5x5xf32> to vector<5xf32>
    %63 = vector.shape_cast %62 : vector<5xf32> to vector<5x1xf32>
    %64 = tpu.reciprocal %63 {approx = true} : vector<5x1xf32> -> vector<5x1xf32>
    %65 = vector.broadcast %64 : vector<5x1xf32> to vector<5x5xf32>
    %66 = arith.mulf %61, %65 : vector<5x5xf32>
    %67 = arith.truncf %66 : vector<5x5xf32> to vector<5x5xbf16>
    %cst_20 = arith.constant dense<0.000000e+00> : vector<5x8xf32>
    %68 = tpu.matmul %67, %55, %cst_20 {dimension_numbers = #tpu.dot_dimension_numbers<[1], [0], [0], [1], [0, 0, 1, 1], [], []>} : vector<5x5xbf16>, vector<5x8xbf16>, vector<5x8xf32> -> vector<5x8xf32>
    %c0_21 = arith.constant 0 : index
    %c24 = arith.constant 24 : index
    %69 = vector.load %arg3[%c0_21, %c24] : memref<5x32xf32, #tpu.memory_space<vmem>>, vector<5x8xf32>
    tpu.vector_store %arg3[%c0_21, %c24], %68 {strides = array<i32>} : memref<5x32xf32, #tpu.memory_space<vmem>>, vector<5x8xf32>,
    %c0_22 = arith.constant 0 : index
    %c0_23 = arith.constant 0 : index
    %70 = vector.load %arg3[%c0_22, %c0_23] : memref<5x32xf32, #tpu.memory_space<vmem>>, vector<5x32xf32>
    %71 = arith.truncf %70 : vector<5x32xf32> to vector<5x32xbf16>
    %c0_24 = arith.constant 0 : index
    %c0_25 = arith.constant 0 : index
    %c0_26 = arith.constant 0 : index
    %72 = vector.load %arg2[%c0_24, %c0_25, %c0_26] : memref<1x5x32xbf16, #tpu.memory_space<vmem>>, vector<1x5x32xbf16>
    %73 = vector.shape_cast %72 : vector<1x5x32xbf16> to vector<5x32xbf16>
    %74 = vector.shape_cast %71 : vector<5x32xbf16> to vector<1x5x32xbf16>
    tpu.vector_store %arg2[%c0_24, %c0_25, %c0_26], %74 {strides = array<i32>} : memref<1x5x32xbf16, #tpu.memory_space<vmem>>, vector<1x5x32xbf16>,
    return
  }
  func.func @transform_0(%arg0: i32) -> (i32, i32, i32) {
    %c0_i32 = arith.constant 0 : i32
    %c0_i32_0 = arith.constant 0 : i32
    %c0_i32_1 = arith.constant 0 : i32
    return %arg0, %c0_i32, %c0_i32_0 : i32, i32, i32
  }
  func.func @transform_1(%arg0: i32) -> (i32, i32, i32) {
    %c0_i32 = arith.constant 0 : i32
    %c0_i32_0 = arith.constant 0 : i32
    %c0_i32_1 = arith.constant 0 : i32
    return %arg0, %c0_i32, %c0_i32_0 : i32, i32, i32
  }
}

module attributes {stable_mosaic.version = 11 : i64} {
  func.func @kernel(%arg0: i32, %arg1: i32, %arg2: memref<16x32xbf16, #tpu.memory_space<vmem>>, %arg3: memref<32x32xbf16, #tpu.memory_space<vmem>>, %arg4: memref<1x32xf32, #tpu.memory_space<vmem>>, %arg5: memref<16x32xf32, #tpu.memory_space<vmem>>, %arg6: memref<16x32xf32, #tpu.memory_space<vmem>>) attributes {dimension_semantics = [#tpu.dimension_semantics<parallel>, #tpu.dimension_semantics<parallel>], iteration_bounds = array<i64: 1, 1>, scalar_prefetch = 0 : i64, scratch_operands = 0 : i64, tpu.core_type = #tpu.core_type<tc>, window_params = [{transform_indices = @transform_0, window_bounds = array<i64: 16, 32>}, {transform_indices = @transform_1, window_bounds = array<i64: 32, 32>}, {transform_indices = @transform_2, window_bounds = array<i64: 1, 32>}, {transform_indices = @transform_3, window_bounds = array<i64: 16, 32>}, {transform_indices = @transform_4, window_bounds = array<i64: 16, 32>}]} {
    %c0 = arith.constant 0 : index
    %c0_0 = arith.constant 0 : index
    %0 = vector.load %arg2[%c0, %c0_0] : memref<16x32xbf16, #tpu.memory_space<vmem>>, vector<16x32xbf16>
    %c0_1 = arith.constant 0 : index
    %c0_2 = arith.constant 0 : index
    %1 = vector.load %arg3[%c0_1, %c0_2] : memref<32x32xbf16, #tpu.memory_space<vmem>>, vector<32x32xbf16>
    %cst = arith.constant dense<0.000000e+00> : vector<16x32xf32>
    %2 = tpu.matmul %0, %1, %cst {dimension_numbers = #tpu.dot_dimension_numbers<[1], [0], [0], [1], [0, 0, 1, 1], [], []>} : vector<16x32xbf16>, vector<32x32xbf16>, vector<16x32xf32> -> vector<16x32xf32>
    %c0_3 = arith.constant 0 : index
    %c0_4 = arith.constant 0 : index
    %3 = vector.load %arg4[%c0_3, %c0_4] : memref<1x32xf32, #tpu.memory_space<vmem>>, vector<1x32xf32>
    %4 = vector.broadcast %3 : vector<1x32xf32> to vector<16x32xf32>
    %5 = arith.addf %2, %4 : vector<16x32xf32>
    %c0_5 = arith.constant 0 : index
    %c0_6 = arith.constant 0 : index
    %6 = vector.load %arg5[%c0_5, %c0_6] : memref<16x32xf32, #tpu.memory_space<vmem>>, vector<16x32xf32>
    %7 = arith.addf %5, %6 : vector<16x32xf32>
    %c0_7 = arith.constant 0 : index
    %c0_8 = arith.constant 0 : index
    %8 = vector.load %arg6[%c0_7, %c0_8] : memref<16x32xf32, #tpu.memory_space<vmem>>, vector<16x32xf32>
    tpu.vector_store %arg6[%c0_7, %c0_8], %7 {strides = array<i32>} : memref<16x32xf32, #tpu.memory_space<vmem>>, vector<16x32xf32>,
    return
  }
  func.func @transform_0(%arg0: i32, %arg1: i32) -> (i32, i32) {
    %c0_i32 = arith.constant 0 : i32
    %c0_i32_0 = arith.constant 0 : i32
    return %arg0, %c0_i32 : i32, i32
  }
  func.func @transform_1(%arg0: i32, %arg1: i32) -> (i32, i32) {
    %c0_i32 = arith.constant 0 : i32
    %c0_i32_0 = arith.constant 0 : i32
    return %c0_i32, %arg1 : i32, i32
  }
  func.func @transform_2(%arg0: i32, %arg1: i32) -> (i32, i32) {
    %c0_i32 = arith.constant 0 : i32
    %c0_i32_0 = arith.constant 0 : i32
    return %c0_i32, %arg1 : i32, i32
  }
  func.func @transform_3(%arg0: i32, %arg1: i32) -> (i32, i32) {
    %c0_i32 = arith.constant 0 : i32
    return %arg0, %arg1 : i32, i32
  }
  func.func @transform_4(%arg0: i32, %arg1: i32) -> (i32, i32) {
    %c0_i32 = arith.constant 0 : i32
    return %arg0, %arg1 : i32, i32
  }
}

module attributes {stable_mosaic.version = 11 : i64} {
  func.func @kernel(%arg0: i32, %arg1: i32, %arg2: memref<16x32xf32, #tpu.memory_space<vmem>>, %arg3: memref<32x128xbf16, #tpu.memory_space<vmem>>, %arg4: memref<1x128xf32, #tpu.memory_space<vmem>>, %arg5: memref<1x32xf32, #tpu.memory_space<vmem>>, %arg6: memref<1x32xf32, #tpu.memory_space<vmem>>, %arg7: memref<16x128xbf16, #tpu.memory_space<vmem>>, %arg8: memref<16x32xbf16, #tpu.memory_space<vmem>>) attributes {dimension_semantics = [#tpu.dimension_semantics<parallel>, #tpu.dimension_semantics<arbitrary>], iteration_bounds = array<i64: 1, 1>, scalar_prefetch = 0 : i64, scratch_operands = 1 : i64, tpu.core_type = #tpu.core_type<tc>, window_params = [{transform_indices = @transform_0, window_bounds = array<i64: 16, 32>}, {transform_indices = @transform_1, window_bounds = array<i64: 32, 128>}, {transform_indices = @transform_2, window_bounds = array<i64: 1, 128>}, {pipeline_mode = #tpu.pipeline_mode<synchronous>, transform_indices = @transform_3, window_bounds = array<i64: 1, 32>}, {pipeline_mode = #tpu.pipeline_mode<synchronous>, transform_indices = @transform_4, window_bounds = array<i64: 1, 32>}, {transform_indices = @transform_5, window_bounds = array<i64: 16, 128>}]} {
    %c0_i32 = arith.constant 0 : i32
    %0 = arith.cmpi eq, %arg1, %c0_i32 : i32
    %1 = arith.extui %0 : i1 to i32
    %c0_i32_0 = arith.constant 0 : i32
    %2 = arith.cmpi ne, %1, %c0_i32_0 : i32
    scf.if %2 {
      %c0_10 = arith.constant 0 : index
      %c0_11 = arith.constant 0 : index
      %19 = vector.load %arg2[%c0_10, %c0_11] : memref<16x32xf32, #tpu.memory_space<vmem>>, vector<16x32xf32>
      %cst_12 = arith.constant dense<0.000000e+00> : vector<16xf32>
      %20 = vector.multi_reduction <add>, %19, %cst_12 [1] : vector<16x32xf32> to vector<16xf32>
      %21 = vector.shape_cast %20 : vector<16xf32> to vector<16x1xf32>
      %cst_13 = arith.constant 3.200000e+01 : f32
      %22 = vector.broadcast %cst_13 : f32 to vector<16x1xf32>
      %23 = arith.divf %21, %22 : vector<16x1xf32>
      %24 = vector.broadcast %23 : vector<16x1xf32> to vector<16x32xf32>
      %25 = arith.subf %19, %24 : vector<16x32xf32>
      %26 = arith.mulf %25, %25 : vector<16x32xf32>
      %cst_14 = arith.constant dense<0.000000e+00> : vector<16xf32>
      %27 = vector.multi_reduction <add>, %26, %cst_14 [1] : vector<16x32xf32> to vector<16xf32>
      %28 = vector.shape_cast %27 : vector<16xf32> to vector<16x1xf32>
      %cst_15 = arith.constant 3.200000e+01 : f32
      %29 = vector.broadcast %cst_15 : f32 to vector<16x1xf32>
      %30 = arith.divf %28, %29 : vector<16x1xf32>
      %31 = vector.broadcast %23 : vector<16x1xf32> to vector<16x32xf32>
      %32 = arith.subf %19, %31 : vector<16x32xf32>
      %cst_16 = arith.constant 9.99999974E-6 : f32
      %33 = vector.broadcast %cst_16 : f32 to vector<16x1xf32>
      %34 = arith.addf %30, %33 : vector<16x1xf32>
      %35 = math.rsqrt %34 : vector<16x1xf32>
      %36 = vector.broadcast %35 : vector<16x1xf32> to vector<16x32xf32>
      %37 = arith.mulf %32, %36 : vector<16x32xf32>
      %c0_17 = arith.constant 0 : index
      %c0_18 = arith.constant 0 : index
      %38 = vector.load %arg5[%c0_17, %c0_18] : memref<1x32xf32, #tpu.memory_space<vmem>>, vector<1x32xf32>
      %39 = vector.broadcast %38 : vector<1x32xf32> to vector<16x32xf32>
      %40 = arith.mulf %37, %39 : vector<16x32xf32>
      %c0_19 = arith.constant 0 : index
      %c0_20 = arith.constant 0 : index
      %41 = vector.load %arg6[%c0_19, %c0_20] : memref<1x32xf32, #tpu.memory_space<vmem>>, vector<1x32xf32>
      %42 = vector.broadcast %41 : vector<1x32xf32> to vector<16x32xf32>
      %43 = arith.addf %40, %42 : vector<16x32xf32>
      %44 = arith.truncf %43 : vector<16x32xf32> to vector<16x32xbf16>
      %c0_21 = arith.constant 0 : index
      %c0_22 = arith.constant 0 : index
      %45 = vector.load %arg8[%c0_21, %c0_22] : memref<16x32xbf16, #tpu.memory_space<vmem>>, vector<16x32xbf16>
      tpu.vector_store %arg8[%c0_21, %c0_22], %44 {strides = array<i32>} : memref<16x32xbf16, #tpu.memory_space<vmem>>, vector<16x32xbf16>,
    } else {
    }
    %c0 = arith.constant 0 : index
    %c0_1 = arith.constant 0 : index
    %3 = vector.load %arg8[%c0, %c0_1] : memref<16x32xbf16, #tpu.memory_space<vmem>>, vector<16x32xbf16>
    %c0_2 = arith.constant 0 : index
    %c0_3 = arith.constant 0 : index
    %4 = vector.load %arg3[%c0_2, %c0_3] : memref<32x128xbf16, #tpu.memory_space<vmem>>, vector<32x128xbf16>
    %cst = arith.constant dense<0.000000e+00> : vector<16x128xf32>
    %5 = tpu.matmul %3, %4, %cst {dimension_numbers = #tpu.dot_dimension_numbers<[1], [0], [0], [1], [0, 0, 1, 1], [], []>} : vector<16x32xbf16>, vector<32x128xbf16>, vector<16x128xf32> -> vector<16x128xf32>
    %c0_4 = arith.constant 0 : index
    %c0_5 = arith.constant 0 : index
    %6 = vector.load %arg4[%c0_4, %c0_5] : memref<1x128xf32, #tpu.memory_space<vmem>>, vector<1x128xf32>
    %7 = vector.broadcast %6 : vector<1x128xf32> to vector<16x128xf32>
    %8 = arith.addf %5, %7 : vector<16x128xf32>
    %cst_6 = arith.constant 1.702000e+00 : f32
    %9 = vector.broadcast %cst_6 : f32 to vector<16x128xf32>
    %10 = arith.mulf %9, %8 : vector<16x128xf32>
    %11 = arith.negf %10 : vector<16x128xf32>
    %12 = math.exp %11 : vector<16x128xf32>
    %cst_7 = arith.constant 1.000000e+00 : f32
    %13 = vector.broadcast %cst_7 : f32 to vector<16x128xf32>
    %14 = arith.addf %13, %12 : vector<16x128xf32>
    %15 = arith.divf %13, %14 : vector<16x128xf32>
    %16 = arith.mulf %8, %15 : vector<16x128xf32>
    %17 = arith.truncf %16 : vector<16x128xf32> to vector<16x128xbf16>
    %c0_8 = arith.constant 0 : index
    %c0_9 = arith.constant 0 : index
    %18 = vector.load %arg7[%c0_8, %c0_9] : memref<16x128xbf16, #tpu.memory_space<vmem>>, vector<16x128xbf16>
    tpu.vector_store %arg7[%c0_8, %c0_9], %17 {strides = array<i32>} : memref<16x128xbf16, #tpu.memory_space<vmem>>, vector<16x128xbf16>,
    return
  }
  func.func @transform_0(%arg0: i32, %arg1: i32) -> (i32, i32) {
    %c0_i32 = arith.constant 0 : i32
    %c0_i32_0 = arith.constant 0 : i32
    return %arg0, %c0_i32 : i32, i32
  }
  func.func @transform_1(%arg0: i32, %arg1: i32) -> (i32, i32) {
    %c0_i32 = arith.constant 0 : i32
    %c0_i32_0 = arith.constant 0 : i32
    return %c0_i32, %arg1 : i32, i32
  }
  func.func @transform_2(%arg0: i32, %arg1: i32) -> (i32, i32) {
    %c0_i32 = arith.constant 0 : i32
    %c0_i32_0 = arith.constant 0 : i32
    return %c0_i32, %arg1 : i32, i32
  }
  func.func @transform_3(%arg0: i32, %arg1: i32) -> (i32, i32) {
    %c0_i32 = arith.constant 0 : i32
    %c0_i32_0 = arith.constant 0 : i32
    %c0_i32_1 = arith.constant 0 : i32
    return %c0_i32, %c0_i32_0 : i32, i32
  }
  func.func @transform_4(%arg0: i32, %arg1: i32) -> (i32, i32) {
    %c0_i32 = arith.constant 0 : i32
    %c0_i32_0 = arith.constant 0 : i32
    %c0_i32_1 = arith.constant 0 : i32
    return %c0_i32, %c0_i32_0 : i32, i32
  }
  func.func @transform_5(%arg0: i32, %arg1: i32) -> (i32, i32) {
    %c0_i32 = arith.constant 0 : i32
    return %arg0, %arg1 : i32, i32
  }
}

module attributes {stable_mosaic.version = 11 : i64} {
  func.func @kernel(%arg0: i32, %arg1: i32, %arg2: memref<16x128xbf16, #tpu.memory_space<vmem>>, %arg3: memref<128x32xbf16, #tpu.memory_space<vmem>>, %arg4: memref<1x32xf32, #tpu.memory_space<vmem>>, %arg5: memref<16x32xf32, #tpu.memory_space<vmem>>, %arg6: memref<16x32xf32, #tpu.memory_space<vmem>>) attributes {dimension_semantics = [#tpu.dimension_semantics<parallel>, #tpu.dimension_semantics<parallel>], iteration_bounds = array<i64: 1, 1>, scalar_prefetch = 0 : i64, scratch_operands = 0 : i64, tpu.core_type = #tpu.core_type<tc>, window_params = [{transform_indices = @transform_0, window_bounds = array<i64: 16, 128>}, {transform_indices = @transform_1, window_bounds = array<i64: 128, 32>}, {transform_indices = @transform_2, window_bounds = array<i64: 1, 32>}, {transform_indices = @transform_3, window_bounds = array<i64: 16, 32>}, {transform_indices = @transform_4, window_bounds = array<i64: 16, 32>}]} {
    %c0 = arith.constant 0 : index
    %c0_0 = arith.constant 0 : index
    %0 = vector.load %arg2[%c0, %c0_0] : memref<16x128xbf16, #tpu.memory_space<vmem>>, vector<16x128xbf16>
    %c0_1 = arith.constant 0 : index
    %c0_2 = arith.constant 0 : index
    %1 = vector.load %arg3[%c0_1, %c0_2] : memref<128x32xbf16, #tpu.memory_space<vmem>>, vector<128x32xbf16>
    %cst = arith.constant dense<0.000000e+00> : vector<16x32xf32>
    %2 = tpu.matmul %0, %1, %cst {dimension_numbers = #tpu.dot_dimension_numbers<[1], [0], [0], [1], [0, 0, 1, 1], [], []>} : vector<16x128xbf16>, vector<128x32xbf16>, vector<16x32xf32> -> vector<16x32xf32>
    %c0_3 = arith.constant 0 : index
    %c0_4 = arith.constant 0 : index
    %3 = vector.load %arg4[%c0_3, %c0_4] : memref<1x32xf32, #tpu.memory_space<vmem>>, vector<1x32xf32>
    %4 = vector.broadcast %3 : vector<1x32xf32> to vector<16x32xf32>
    %5 = arith.addf %2, %4 : vector<16x32xf32>
    %c0_5 = arith.constant 0 : index
    %c0_6 = arith.constant 0 : index
    %6 = vector.load %arg5[%c0_5, %c0_6] : memref<16x32xf32, #tpu.memory_space<vmem>>, vector<16x32xf32>
    %7 = arith.addf %5, %6 : vector<16x32xf32>
    %c0_7 = arith.constant 0 : index
    %c0_8 = arith.constant 0 : index
    %8 = vector.load %arg6[%c0_7, %c0_8] : memref<16x32xf32, #tpu.memory_space<vmem>>, vector<16x32xf32>
    tpu.vector_store %arg6[%c0_7, %c0_8], %7 {strides = array<i32>} : memref<16x32xf32, #tpu.memory_space<vmem>>, vector<16x32xf32>,
    return
  }
  func.func @transform_0(%arg0: i32, %arg1: i32) -> (i32, i32) {
    %c0_i32 = arith.constant 0 : i32
    %c0_i32_0 = arith.constant 0 : i32
    return %arg0, %c0_i32 : i32, i32
  }
  func.func @transform_1(%arg0: i32, %arg1: i32) -> (i32, i32) {
    %c0_i32 = arith.constant 0 : i32
    %c0_i32_0 = arith.constant 0 : i32
    return %c0_i32, %arg1 : i32, i32
  }
  func.func @transform_2(%arg0: i32, %arg1: i32) -> (i32, i32) {
    %c0_i32 = arith.constant 0 : i32
    %c0_i32_0 = arith.constant 0 : i32
    return %c0_i32, %arg1 : i32, i32
  }
  func.func @transform_3(%arg0: i32, %arg1: i32) -> (i32, i32) {
    %c0_i32 = arith.constant 0 : i32
    return %arg0, %arg1 : i32, i32
  }
  func.func @transform_4(%arg0: i32, %arg1: i32) -> (i32, i32) {
    %c0_i32 = arith.constant 0 : i32
    return %arg0, %arg1 : i32, i32
  }
}

module attributes {stable_mosaic.version = 11 : i64} {
  func.func @kernel(%arg0: i32, %arg1: i32, %arg2: memref<8x32xf32, #tpu.memory_space<vmem>>, %arg3: memref<32x16xbf16, #tpu.memory_space<vmem>>, %arg4: memref<1x16xf32, #tpu.memory_space<vmem>>, %arg5: memref<1x32xf32, #tpu.memory_space<vmem>>, %arg6: memref<1x32xf32, #tpu.memory_space<vmem>>, %arg7: memref<8x16xf32, #tpu.memory_space<vmem>>, %arg8: memref<8x32xbf16, #tpu.memory_space<vmem>>) attributes {dimension_semantics = [#tpu.dimension_semantics<parallel>, #tpu.dimension_semantics<arbitrary>], iteration_bounds = array<i64: 1, 1>, scalar_prefetch = 0 : i64, scratch_operands = 1 : i64, tpu.core_type = #tpu.core_type<tc>, window_params = [{transform_indices = @transform_0, window_bounds = array<i64: 8, 32>}, {transform_indices = @transform_1, window_bounds = array<i64: 32, 16>}, {transform_indices = @transform_2, window_bounds = array<i64: 1, 16>}, {pipeline_mode = #tpu.pipeline_mode<synchronous>, transform_indices = @transform_3, window_bounds = array<i64: 1, 32>}, {pipeline_mode = #tpu.pipeline_mode<synchronous>, transform_indices = @transform_4, window_bounds = array<i64: 1, 32>}, {transform_indices = @transform_5, window_bounds = array<i64: 8, 16>}]} {
    %c0_i32 = arith.constant 0 : i32
    %0 = arith.cmpi eq, %arg1, %c0_i32 : i32
    %1 = arith.extui %0 : i1 to i32
    %c0_i32_0 = arith.constant 0 : i32
    %2 = arith.cmpi ne, %1, %c0_i32_0 : i32
    scf.if %2 {
      %c0_8 = arith.constant 0 : index
      %c0_9 = arith.constant 0 : index
      %10 = vector.load %arg2[%c0_8, %c0_9] : memref<8x32xf32, #tpu.memory_space<vmem>>, vector<8x32xf32>
      %cst_10 = arith.constant dense<0.000000e+00> : vector<8xf32>
      %11 = vector.multi_reduction <add>, %10, %cst_10 [1] : vector<8x32xf32> to vector<8xf32>
      %12 = vector.shape_cast %11 : vector<8xf32> to vector<8x1xf32>
      %cst_11 = arith.constant 3.200000e+01 : f32
      %13 = vector.broadcast %cst_11 : f32 to vector<8x1xf32>
      %14 = arith.divf %12, %13 : vector<8x1xf32>
      %15 = vector.broadcast %14 : vector<8x1xf32> to vector<8x32xf32>
      %16 = arith.subf %10, %15 : vector<8x32xf32>
      %17 = arith.mulf %16, %16 : vector<8x32xf32>
      %cst_12 = arith.constant dense<0.000000e+00> : vector<8xf32>
      %18 = vector.multi_reduction <add>, %17, %cst_12 [1] : vector<8x32xf32> to vector<8xf32>
      %19 = vector.shape_cast %18 : vector<8xf32> to vector<8x1xf32>
      %cst_13 = arith.constant 3.200000e+01 : f32
      %20 = vector.broadcast %cst_13 : f32 to vector<8x1xf32>
      %21 = arith.divf %19, %20 : vector<8x1xf32>
      %22 = vector.broadcast %14 : vector<8x1xf32> to vector<8x32xf32>
      %23 = arith.subf %10, %22 : vector<8x32xf32>
      %cst_14 = arith.constant 9.99999974E-6 : f32
      %24 = vector.broadcast %cst_14 : f32 to vector<8x1xf32>
      %25 = arith.addf %21, %24 : vector<8x1xf32>
      %26 = math.rsqrt %25 : vector<8x1xf32>
      %27 = vector.broadcast %26 : vector<8x1xf32> to vector<8x32xf32>
      %28 = arith.mulf %23, %27 : vector<8x32xf32>
      %c0_15 = arith.constant 0 : index
      %c0_16 = arith.constant 0 : index
      %29 = vector.load %arg5[%c0_15, %c0_16] : memref<1x32xf32, #tpu.memory_space<vmem>>, vector<1x32xf32>
      %30 = vector.broadcast %29 : vector<1x32xf32> to vector<8x32xf32>
      %31 = arith.mulf %28, %30 : vector<8x32xf32>
      %c0_17 = arith.constant 0 : index
      %c0_18 = arith.constant 0 : index
      %32 = vector.load %arg6[%c0_17, %c0_18] : memref<1x32xf32, #tpu.memory_space<vmem>>, vector<1x32xf32>
      %33 = vector.broadcast %32 : vector<1x32xf32> to vector<8x32xf32>
      %34 = arith.addf %31, %33 : vector<8x32xf32>
      %35 = arith.truncf %34 : vector<8x32xf32> to vector<8x32xbf16>
      %c0_19 = arith.constant 0 : index
      %c0_20 = arith.constant 0 : index
      %36 = vector.load %arg8[%c0_19, %c0_20] : memref<8x32xbf16, #tpu.memory_space<vmem>>, vector<8x32xbf16>
      tpu.vector_store %arg8[%c0_19, %c0_20], %35 {strides = array<i32>} : memref<8x32xbf16, #tpu.memory_space<vmem>>, vector<8x32xbf16>,
    } else {
    }
    %c0 = arith.constant 0 : index
    %c0_1 = arith.constant 0 : index
    %3 = vector.load %arg8[%c0, %c0_1] : memref<8x32xbf16, #tpu.memory_space<vmem>>, vector<8x32xbf16>
    %c0_2 = arith.constant 0 : index
    %c0_3 = arith.constant 0 : index
    %4 = vector.load %arg3[%c0_2, %c0_3] : memref<32x16xbf16, #tpu.memory_space<vmem>>, vector<32x16xbf16>
    %cst = arith.constant dense<0.000000e+00> : vector<8x16xf32>
    %5 = tpu.matmul %3, %4, %cst {dimension_numbers = #tpu.dot_dimension_numbers<[1], [0], [0], [1], [0, 0, 1, 1], [], []>} : vector<8x32xbf16>, vector<32x16xbf16>, vector<8x16xf32> -> vector<8x16xf32>
    %c0_4 = arith.constant 0 : index
    %c0_5 = arith.constant 0 : index
    %6 = vector.load %arg4[%c0_4, %c0_5] : memref<1x16xf32, #tpu.memory_space<vmem>>, vector<1x16xf32>
    %7 = vector.broadcast %6 : vector<1x16xf32> to vector<8x16xf32>
    %8 = arith.addf %5, %7 : vector<8x16xf32>
    %c0_6 = arith.constant 0 : index
    %c0_7 = arith.constant 0 : index
    %9 = vector.load %arg7[%c0_6, %c0_7] : memref<8x16xf32, #tpu.memory_space<vmem>>, vector<8x16xf32>
    tpu.vector_store %arg7[%c0_6, %c0_7], %8 {strides = array<i32>} : memref<8x16xf32, #tpu.memory_space<vmem>>, vector<8x16xf32>,
    return
  }
  func.func @transform_0(%arg0: i32, %arg1: i32) -> (i32, i32) {
    %c0_i32 = arith.constant 0 : i32
    %c0_i32_0 = arith.constant 0 : i32
    return %arg0, %c0_i32 : i32, i32
  }
  func.func @transform_1(%arg0: i32, %arg1: i32) -> (i32, i32) {
    %c0_i32 = arith.constant 0 : i32
    %c0_i32_0 = arith.constant 0 : i32
    return %c0_i32, %arg1 : i32, i32
  }
  func.func @transform_2(%arg0: i32, %arg1: i32) -> (i32, i32) {
    %c0_i32 = arith.constant 0 : i32
    %c0_i32_0 = arith.constant 0 : i32
    return %c0_i32, %arg1 : i32, i32
  }
  func.func @transform_3(%arg0: i32, %arg1: i32) -> (i32, i32) {
    %c0_i32 = arith.constant 0 : i32
    %c0_i32_0 = arith.constant 0 : i32
    %c0_i32_1 = arith.constant 0 : i32
    return %c0_i32, %c0_i32_0 : i32, i32
  }
  func.func @transform_4(%arg0: i32, %arg1: i32) -> (i32, i32) {
    %c0_i32 = arith.constant 0 : i32
    %c0_i32_0 = arith.constant 0 : i32
    %c0_i32_1 = arith.constant 0 : i32
    return %c0_i32, %c0_i32_0 : i32, i32
  }
  func.func @transform_5(%arg0: i32, %arg1: i32) -> (i32, i32) {
    %c0_i32 = arith.constant 0 : i32
    return %arg0, %arg1 : i32, i32
  }
}

</mosaic_0001>

<llo_original>
// kernel: encode_image.14
$region0: #{encode_image.14}
  #allocation0 [shape = 'u32[]', space=smem, size = 0x4, offset = 0x4, fixed_abs, tag = 'smem constant byte address 0x4 - core index']
  #allocation1 [shape = 'u32[144,128]{1,0:T(1,128)}', space=vmem, size = 0x12000, scoped, tag = 'internal scratch']
  %s0 = inlined_call_operand.vmem [shape: f32[16,32], index: 0, kind: input, shape index: {}]
  %s1 = inlined_call_operand.vmem [shape: f32[1,32], index: 1, kind: input, shape index: {}]
  %s2 = inlined_call_operand.vmem [shape: f32[1,32], index: 2, kind: input, shape index: {}]
  %s3 = inlined_call_operand.vmem [shape: f32[16,32], index: 3, kind: output, shape index: {}]
  %s4 = sld [smem:[#allocation0]]
  $region22: #{encode_image.14} parent=0
    _
  %s6 = ssub.s32 1, %s4
  %s7 = scalar_select 0, %s6, %s4
  // Predicated region
  $region2: #{encode_image.14} parent=0 // pred_check
    _
  $region3: #{encode_image.14} parent=0 // pred_check_branch
    %9 = sbr.rel (0) target = $region5
  $region4: #{encode_image.14} parent=0 // pred_region
    _
  $region5: #{encode_image.14} parent=0 // pred_fallthru
    _
  // Predicated region
  $region6: #{encode_image.14} parent=0 // pred_check
    _
  $region7: #{encode_image.14} parent=0 // pred_check_branch
    %11 = sbr.rel (0) target = $region9
  $region8: #{encode_image.14} parent=0 // pred_region
    _
  $region9: #{encode_image.14} parent=0 // pred_fallthru
    _
  // Predicated region
  $region10: #{encode_image.14} parent=0 // pred_check
    _
  $region11: #{encode_image.14} parent=0 // pred_check_branch
    %13 = sbr.rel (0) target = $region13
  $region12: #{encode_image.14} parent=0 // pred_region
    _
  $region13: #{encode_image.14} parent=0 // pred_fallthru
    _
  %v14 = vld [vmem:[%s0] sm:$0xff]
  %v15 = vld [vmem:[%s0 + $0x8] sm:$0xff]
  %vm16 = vcmask 261120
  %v17 = vsel %vm16, %v14, 0.0
  %18 = vadd.xlane.f32.xlu0 %v17
  %v19 = vpop.xlane.xlu0 %18
  %v20 = vsel %vm16, %v15, 0.0
  %21 = vadd.xlane.f32.xlu0 %v20
  %v22 = vpop.xlane.xlu0 %21
  %v23 = vrcp.pop 32.0
  %v24 = vmul.f32 %v19, %v23
  %v25 = vmul.f32 %v22, %v23
  %v26 = vsub.f32 %v14, %v24
  %v27 = vsub.f32 %v15, %v25
  %v28 = vmul.f32 %v26, %v26
  %v29 = vmul.f32 %v27, %v27
  %v30 = vsel %vm16, %v28, 0.0
  %31 = vadd.xlane.f32.xlu0 %v30
  %v32 = vpop.xlane.xlu0 %31
  %v33 = vsel %vm16, %v29, 0.0
  %34 = vadd.xlane.f32.xlu0 %v33
  %v35 = vpop.xlane.xlu0 %34
  %v36 = vmul.f32 %v32, %v23
  %v37 = vmul.f32 %v35, %v23
  %v38 = vadd.f32 %v36, 1e-05
  %v39 = vadd.f32 %v37, 1e-05
  %v40 = vrsqrt.pop %v38
  %v41 = vrsqrt.pop %v39
  %v42 = vmul.f32 %v26, %v40
  %v43 = vmul.f32 %v27, %v41
  %v44 = vld [vmem:[%s1] sm:$0x1]
  %v46 = vlaneseq
  %v47 = vshrl.u32 %v46, 7
  %v48 = vsub.s32 0, %v47
  %v49 = vrot.slane %v44, %v48
  %v51 = vmul.f32 %v42, %v49
  %v52 = vmul.f32 %v43, %v49
  %v53 = vld [vmem:[%s2] sm:$0x1]
  %v55 = vlaneseq
  %v56 = vshrl.u32 %v55, 7
  %v57 = vsub.s32 0, %v56
  %v58 = vrot.slane %v53, %v57
  %v60 = vadd.f32 %v51, %v58
  %v61 = vadd.f32 %v52, %v58
  %62 = vst.msk [vmem:[%s3] sm:$0xff] %vm16, %v60
  %63 = vst.msk [vmem:[%s3 + $0x8] sm:$0xff] %vm16, %v61
  // Predicated region
  $region14: #{encode_image.14} parent=0 // pred_check
    _
  $region15: #{encode_image.14} parent=0 // pred_check_branch
    %65 = sbr.rel (0) target = $region17
  $region16: #{encode_image.14} parent=0 // pred_region
    _
  $region17: #{encode_image.14} parent=0 // pred_fallthru
    _
  // Predicated region
  $region18: #{encode_image.14} parent=0 // pred_check
    _
  $region19: #{encode_image.14} parent=0 // pred_check_branch
    %67 = sbr.rel (0) target = $region21
  $region20: #{encode_image.14} parent=0 // pred_region
    _
  $region21: #{encode_image.14} parent=0 // pred_fallthru
    _

// kernel: encode_image.13
$region0: #{encode_image.13}
  #allocation0 [shape = 'u32[]', space=smem, size = 0x4, offset = 0x4, fixed_abs, tag = 'smem constant byte address 0x4 - core index']
  #allocation1 [shape = 'u32[144,128]{1,0:T(1,128)}', space=vmem, size = 0x12000, scoped, tag = 'internal scratch']
  %s0 = inlined_call_operand.vmem [shape: f32[8,256], index: 0, kind: input, shape index: {}]
  %s1 = inlined_call_operand.vmem [shape: bf16[256,32], index: 1, kind: input, shape index: {}]
  %s2 = inlined_call_operand.vmem [shape: f32[1,32], index: 2, kind: input, shape index: {}]
  %s3 = inlined_call_operand.vmem [shape: f32[8,32], index: 3, kind: output, shape index: {}]
  %s4 = sld [smem:[#allocation0]]
  $region22: #{encode_image.13} parent=0
    _
  %s6 = ssub.s32 1, %s4
  %s7 = scalar_select 0, %s6, %s4
  // Predicated region
  $region2: #{encode_image.13} parent=0 // pred_check
    _
  $region3: #{encode_image.13} parent=0 // pred_check_branch
    %9 = sbr.rel (0) target = $region5
  $region4: #{encode_image.13} parent=0 // pred_region
    _
  $region5: #{encode_image.13} parent=0 // pred_fallthru
    _
  // Predicated region
  $region6: #{encode_image.13} parent=0 // pred_check
    _
  $region7: #{encode_image.13} parent=0 // pred_check_branch
    %11 = sbr.rel (0) target = $region9
  $region8: #{encode_image.13} parent=0 // pred_region
    _
  $region9: #{encode_image.13} parent=0 // pred_fallthru
    _
  // Predicated region
  $region10: #{encode_image.13} parent=0 // pred_check
    _
  $region11: #{encode_image.13} parent=0 // pred_check_branch
    %13 = sbr.rel (0) target = $region13
  $region12: #{encode_image.13} parent=0 // pred_region
    _
  $region13: #{encode_image.13} parent=0 // pred_fallthru
    _
  %v15 = vld [vmem:[%s0] sm:$0xff]
  %v16 = vld [vmem:[%s0 + $0x8] sm:$0xff]
  %v17 = vpack.c.bf16 %v15, %v15
  %v18 = vpack.c.bf16 %v16, %v16
  %v19 = vld [vmem:[%s1] sm:$0xf]
  %v20 = vld [vmem:[%s1 + $0x4] sm:$0xf]
  %v21 = vld [vmem:[%s1 + $0x8] sm:$0xf]
  %v22 = vld [vmem:[%s1 + $0xc] sm:$0xf]
  %v23 = vld [vmem:[%s1 + $0x10] sm:$0xf]
  %v24 = vld [vmem:[%s1 + $0x14] sm:$0xf]
  %v25 = vld [vmem:[%s1 + $0x18] sm:$0xf]
  %v26 = vld [vmem:[%s1 + $0x1c] sm:$0xf]
  %v27 = vld [vmem:[%s1 + $0x20] sm:$0xf]
  %v28 = vld [vmem:[%s1 + $0x24] sm:$0xf]
  %v29 = vld [vmem:[%s1 + $0x28] sm:$0xf]
  %v30 = vld [vmem:[%s1 + $0x2c] sm:$0xf]
  %v31 = vld [vmem:[%s1 + $0x30] sm:$0xf]
  %v32 = vld [vmem:[%s1 + $0x34] sm:$0xf]
  %v33 = vld [vmem:[%s1 + $0x38] sm:$0xf]
  %v34 = vld [vmem:[%s1 + $0x3c] sm:$0xf]
  %v35 = vld [vmem:[%s1 + $0x40] sm:$0xf]
  %v36 = vld [vmem:[%s1 + $0x44] sm:$0xf]
  %v37 = vld [vmem:[%s1 + $0x48] sm:$0xf]
  %v38 = vld [vmem:[%s1 + $0x4c] sm:$0xf]
  %v39 = vld [vmem:[%s1 + $0x50] sm:$0xf]
  %v40 = vld [vmem:[%s1 + $0x54] sm:$0xf]
  %v41 = vld [vmem:[%s1 + $0x58] sm:$0xf]
  %v42 = vld [vmem:[%s1 + $0x5c] sm:$0xf]
  %v43 = vld [vmem:[%s1 + $0x60] sm:$0xf]
  %v44 = vld [vmem:[%s1 + $0x64] sm:$0xf]
  %v45 = vld [vmem:[%s1 + $0x68] sm:$0xf]
  %v46 = vld [vmem:[%s1 + $0x6c] sm:$0xf]
  %v47 = vld [vmem:[%s1 + $0x70] sm:$0xf]
  %v48 = vld [vmem:[%s1 + $0x74] sm:$0xf]
  %v49 = vld [vmem:[%s1 + $0x78] sm:$0xf]
  %v50 = vld [vmem:[%s1 + $0x7c] sm:$0xf]
  %v51 = vld [vmem:[%s2] sm:$0x1]
  %v53 = vlaneseq
  %v54 = vshrl.u32 %v53, 7
  %v55 = vsub.s32 0, %v54
  %v56 = vrot.slane %v51, %v55
  %v90 = vunpack.c.l.b16 %v19
  %v91 = vunpack.c.l.b16 %v20
  %v92 = vunpack.c.l.b16 %v21
  %v93 = vunpack.c.l.b16 %v22
  %v94 = vunpack.c.l.b16 %v23
  %v95 = vunpack.c.l.b16 %v24
  %v96 = vunpack.c.l.b16 %v25
  %v97 = vunpack.c.l.b16 %v26
  %v98 = vunpack.c.l.b16 %v27
  %v99 = vunpack.c.l.b16 %v28
  %v100 = vunpack.c.l.b16 %v29
  %v101 = vunpack.c.l.b16 %v30
  %v102 = vunpack.c.l.b16 %v31
  %v103 = vunpack.c.l.b16 %v32
  %v104 = vunpack.c.l.b16 %v33
  %v105 = vunpack.c.l.b16 %v34
  %v106 = vunpack.c.l.b16 %v35
  %v107 = vunpack.c.l.b16 %v36
  %v108 = vunpack.c.l.b16 %v37
  %v109 = vunpack.c.l.b16 %v38
  %v110 = vunpack.c.l.b16 %v39
  %v111 = vunpack.c.l.b16 %v40
  %v112 = vunpack.c.l.b16 %v41
  %v113 = vunpack.c.l.b16 %v42
  %v114 = vunpack.c.l.b16 %v43
  %v115 = vunpack.c.l.b16 %v44
  %v116 = vunpack.c.l.b16 %v45
  %v117 = vunpack.c.l.b16 %v46
  %v118 = vunpack.c.l.b16 %v47
  %v119 = vunpack.c.l.b16 %v48
  %v120 = vunpack.c.l.b16 %v49
  %v121 = vunpack.c.l.b16 %v50
  %v122 = vpack.c.b16 %v91, %v90
  %v123 = vpack.c.b16 %v93, %v92
  %v124 = vpack.c.b16 %v95, %v94
  %v125 = vpack.c.b16 %v97, %v96
  %v126 = vpack.c.b16 %v99, %v98
  %v127 = vpack.c.b16 %v101, %v100
  %v128 = vpack.c.b16 %v103, %v102
  %v129 = vpack.c.b16 %v105, %v104
  %v130 = vpack.c.b16 %v107, %v106
  %v131 = vpack.c.b16 %v109, %v108
  %v132 = vpack.c.b16 %v111, %v110
  %v133 = vpack.c.b16 %v113, %v112
  %v134 = vpack.c.b16 %v115, %v114
  %v135 = vpack.c.b16 %v117, %v116
  %v136 = vpack.c.b16 %v119, %v118
  %v137 = vpack.c.b16 %v121, %v120
  %154 = vmatprep.subr.bf16.mxu0 0
  %155 = vmatpush1.bf16.msra.mxu0 %v122
  %156 = vmatprep.subr.bf16.mxu0 0
  %157 = vmatpush1.bf16.msra.mxu0 %v123
  %158 = vmatprep.subr.bf16.mxu0 0
  %159 = vmatpush1.bf16.msra.mxu0 %v124
  %160 = vmatprep.subr.bf16.mxu0 0
  %161 = vmatpush1.bf16.msra.mxu0 %v125
  %162 = vmatprep.subr.bf16.mxu0 0
  %163 = vmatpush1.bf16.msra.mxu0 %v126
  %164 = vmatprep.subr.bf16.mxu0 0
  %165 = vmatpush1.bf16.msra.mxu0 %v127
  %166 = vmatprep.subr.bf16.mxu0 0
  %167 = vmatpush1.bf16.msra.mxu0 %v128
  %168 = vmatprep.subr.bf16.mxu0 0
  %169 = vmatpush1.bf16.msra.mxu0 %v129
  %170 = vmatprep.subr.bf16.mxu0 0
  %171 = vmatpush1.bf16.msra.mxu0 %v130
  %172 = vmatprep.subr.bf16.mxu0 0
  %173 = vmatpush1.bf16.msra.mxu0 %v131
  %174 = vmatprep.subr.bf16.mxu0 0
  %175 = vmatpush1.bf16.msra.mxu0 %v132
  %176 = vmatprep.subr.bf16.mxu0 0
  %177 = vmatpush1.bf16.msra.mxu0 %v133
  %178 = vmatprep.subr.bf16.mxu0 0
  %179 = vmatpush1.bf16.msra.mxu0 %v134
  %180 = vmatprep.subr.bf16.mxu0 0
  %181 = vmatpush1.bf16.msra.mxu0 %v135
  %182 = vmatprep.subr.bf16.mxu0 0
  %183 = vmatpush1.bf16.msra.mxu0 %v136
  %184 = vmatprep.subr.bf16.mxu0 0
  %185 = vmatpush1.bf16.msra.mxu0 %v137
  %186 = vmatprep.mubr.bf16.mxu0 %v18
  %187 = vmatmul.mubr.bf16.gmra.mrb[0].mxu0 %v17
  %v188 = vpop.f32.mrb[0].mxu0
  %v189 = vadd.f32 %v56, %v188
  %v190 = vpop.f32.mrb[0].mxu0
  %v191 = vpop.f32.mrb[0].mxu0
  %v192 = vpop.f32.mrb[0].mxu0
  %193 = vdwg.mxu0
  %vm194 = vcmask 261120
  %195 = vst.msk [vmem:[%s3] sm:$0xff] %vm194, %v189
  // Predicated region
  $region14: #{encode_image.13} parent=0 // pred_check
    _
  $region15: #{encode_image.13} parent=0 // pred_check_branch
    %197 = sbr.rel (0) target = $region17
  $region16: #{encode_image.13} parent=0 // pred_region
    _
  $region17: #{encode_image.13} parent=0 // pred_fallthru
    _
  // Predicated region
  $region18: #{encode_image.13} parent=0 // pred_check
    _
  $region19: #{encode_image.13} parent=0 // pred_check_branch
    %199 = sbr.rel (0) target = $region21
  $region20: #{encode_image.13} parent=0 // pred_region
    _
  $region21: #{encode_image.13} parent=0 // pred_fallthru
    _

// kernel: encode_image.15
$region0: #{encode_image.15}
  #allocation0 [shape = 'u32[]', space=smem, size = 0x4, offset = 0x4, fixed_abs, tag = 'smem constant byte address 0x4 - core index']
  #allocation1 [shape = 'u32[144,128]{1,0:T(1,128)}', space=vmem, size = 0x12000, scoped, tag = 'internal scratch']
  #allocation2 [shape = 'bf16[16,32]{1,0:T(16,128)(2,1)}', space=vmem, size = 0x1000, scoped, tag = 'scratch operand']
  %s0 = inlined_call_operand.vmem [shape: f32[16,32], index: 0, kind: input, shape index: {}]
  %s1 = inlined_call_operand.vmem [shape: bf16[32,96], index: 1, kind: input, shape index: {}]
  %s2 = inlined_call_operand.vmem [shape: f32[1,96], index: 2, kind: input, shape index: {}]
  %s3 = inlined_call_operand.vmem [shape: f32[1,32], index: 3, kind: input, shape index: {}]
  %s4 = inlined_call_operand.vmem [shape: f32[1,32], index: 4, kind: input, shape index: {}]
  %s5 = inlined_call_operand.vmem [shape: bf16[16,96], index: 5, kind: output, shape index: {}]
  %s6 = sld [smem:[#allocation0]]
  $region34: #{encode_image.15} parent=0
    _
  %s8 = ssub.s32 1, %s6
  %s9 = scalar_select 0, %s8, %s6
  // Predicated region
  $region2: #{encode_image.15} parent=0 // pred_check
    _
  $region3: #{encode_image.15} parent=0 // pred_check_branch
    %11 = sbr.rel (0) target = $region5
  $region4: #{encode_image.15} parent=0 // pred_region
    _
  $region5: #{encode_image.15} parent=0 // pred_fallthru
    _
  // Predicated region
  $region6: #{encode_image.15} parent=0 // pred_check
    _
  $region7: #{encode_image.15} parent=0 // pred_check_branch
    %13 = sbr.rel (0) target = $region9
  $region8: #{encode_image.15} parent=0 // pred_region
    _
  $region9: #{encode_image.15} parent=0 // pred_fallthru
    _
  // Predicated region
  $region10: #{encode_image.15} parent=0 // pred_check
    _
  $region11: #{encode_image.15} parent=0 // pred_check_branch
    %15 = sbr.rel (0) target = $region13
  $region12: #{encode_image.15} parent=0 // pred_region
    _
  $region13: #{encode_image.15} parent=0 // pred_fallthru
    _
  // Predicated region
  $region14: #{encode_image.15} parent=0 // pred_check
    _
  $region15: #{encode_image.15} parent=0 // pred_check_branch
    %17 = sbr.rel (0) target = $region17
  $region16: #{encode_image.15} parent=0 // pred_region
    _
  $region17: #{encode_image.15} parent=0 // pred_fallthru
    _
  // Predicated region
  $region18: #{encode_image.15} parent=0 // pred_check
    _
  $region19: #{encode_image.15} parent=0 // pred_check_branch
    %19 = sbr.rel (0) target = $region21
  $region20: #{encode_image.15} parent=0 // pred_region
    _
  $region21: #{encode_image.15} parent=0 // pred_fallthru
    _
  %p21 = scmp.eq.s32.totalorder 0, 0
  // Predicated region
  $region22: #{encode_image.15} parent=0 // pred_check
    %p22 = pneg %p21
  $region23: #{encode_image.15} parent=0 // pred_check_branch
    %24 = sbr.rel (%p22) target = $region25
  $region24: #{encode_image.15} parent=0 // pred_region
    %v25 = vld [vmem:[%s0] sm:$0xff]
    %v26 = vld [vmem:[%s0 + $0x8] sm:$0xff]
    %vm27 = vcmask 261120
    %v28 = vsel %vm27, %v25, 0.0
    %29 = vadd.xlane.f32.xlu0 %v28
    %v30 = vpop.xlane.xlu0 %29
    %v31 = vsel %vm27, %v26, 0.0
    %32 = vadd.xlane.f32.xlu0 %v31
    %v33 = vpop.xlane.xlu0 %32
    %v34 = vrcp.pop 32.0
    %v35 = vmul.f32 %v30, %v34
    %v36 = vmul.f32 %v33, %v34
    %v37 = vsub.f32 %v25, %v35
    %v38 = vsub.f32 %v26, %v36
    %v39 = vmul.f32 %v37, %v37
    %v40 = vmul.f32 %v38, %v38
    %v41 = vsel %vm27, %v39, 0.0
    %42 = vadd.xlane.f32.xlu0 %v41
    %v43 = vpop.xlane.xlu0 %42
    %v44 = vsel %vm27, %v40, 0.0
    %45 = vadd.xlane.f32.xlu0 %v44
    %v46 = vpop.xlane.xlu0 %45
    %v47 = vmul.f32 %v43, %v34
    %v48 = vmul.f32 %v46, %v34
    %v49 = vadd.f32 %v47, 1e-05
    %v50 = vadd.f32 %v48, 1e-05
    %v51 = vrsqrt.pop %v49
    %v52 = vrsqrt.pop %v50
    %v53 = vmul.f32 %v37, %v51
    %v54 = vmul.f32 %v38, %v52
    %v55 = vld [vmem:[%s3] sm:$0x1]
    %v57 = vlaneseq
    %v58 = vshrl.u32 %v57, 7
    %v59 = vsub.s32 0, %v58
    %v60 = vrot.slane %v55, %v59
    %v62 = vmul.f32 %v53, %v60
    %v63 = vmul.f32 %v54, %v60
    %v64 = vld [vmem:[%s4] sm:$0x1]
    %v66 = vlaneseq
    %v67 = vshrl.u32 %v66, 7
    %v68 = vsub.s32 0, %v67
    %v69 = vrot.slane %v64, %v68
    %v71 = vadd.f32 %v62, %v69
    %v72 = vadd.f32 %v63, %v69
    %v73 = vpack.c.bf16 %v72, %v71
    %74 = vst.msk [vmem:[#allocation2] sm:$0xff] %vm27, %v73
  $region25: #{encode_image.15} parent=0 // pred_fallthru
    _
  %v75 = vld [vmem:[#allocation2] sm:$0xff]
  %v76 = vld [vmem:[%s1] sm:$0xf]
  %v77 = vld [vmem:[%s1 + $0x4] sm:$0xf]
  %v78 = vld [vmem:[%s1 + $0x8] sm:$0xf]
  %v79 = vld [vmem:[%s1 + $0xc] sm:$0xf]
  %v80 = vld [vmem:[%s2] sm:$0x1]
  %v82 = vlaneseq
  %v83 = vshrl.u32 %v82, 7
  %v84 = vsub.s32 0, %v83
  %v85 = vrot.slane %v80, %v84
  %v91 = vunpack.c.l.b16 %v76
  %v92 = vunpack.c.l.b16 %v77
  %v93 = vunpack.c.l.b16 %v78
  %v94 = vunpack.c.l.b16 %v79
  %v95 = vpack.c.b16 %v92, %v91
  %v96 = vpack.c.b16 %v94, %v93
  %vm99 = vcmask 261120
  %v101 = vsel %vm99, %v75, 0
  %103 = vmatprep.subr.bf16.mxu0 0
  %104 = vmatpush1.bf16.msra.mxu0 %v95
  %105 = vmatprep.subr.bf16.mxu0 0
  %106 = vmatpush1.bf16.msra.mxu0 %v96
  %107 = vmatprep.subr.bf16.mxu0 0
  %108 = vmatpush1.bf16.msra.mxu0 0
  %109 = vmatprep.subr.bf16.mxu0 0
  %110 = vmatpush1.bf16.msra.mxu0 0
  %111 = vmatprep.subr.bf16.mxu0 0
  %112 = vmatpush1.bf16.msra.mxu0 0
  %113 = vmatprep.subr.bf16.mxu0 0
  %114 = vmatpush1.bf16.msra.mxu0 0
  %115 = vmatprep.subr.bf16.mxu0 0
  %116 = vmatpush1.bf16.msra.mxu0 0
  %117 = vmatprep.subr.bf16.mxu0 0
  %118 = vmatpush1.bf16.msra.mxu0 0
  %119 = vmatprep.subr.bf16.mxu0 0
  %120 = vmatpush1.bf16.msra.mxu0 0
  %121 = vmatprep.subr.bf16.mxu0 0
  %122 = vmatpush1.bf16.msra.mxu0 0
  %123 = vmatprep.subr.bf16.mxu0 0
  %124 = vmatpush1.bf16.msra.mxu0 0
  %125 = vmatprep.subr.bf16.mxu0 0
  %126 = vmatpush1.bf16.msra.mxu0 0
  %127 = vmatprep.subr.bf16.mxu0 0
  %128 = vmatpush1.bf16.msra.mxu0 0
  %129 = vmatprep.subr.bf16.mxu0 0
  %130 = vmatpush1.bf16.msra.mxu0 0
  %131 = vmatprep.subr.bf16.mxu0 0
  %132 = vmatpush1.bf16.msra.mxu0 0
  %133 = vmatprep.subr.bf16.mxu0 0
  %134 = vmatpush1.bf16.msra.mxu0 0
  %135 = vmatprep.mubr.bf16.mxu0 0
  %136 = vmatmul.mubr.bf16.gmra.mrb[0].mxu0 %v101
  %v137 = vpop.f32.mrb[0].mxu0
  %v138 = vadd.f32 %v85, %v137
  %v139 = vpop.f32.mrb[0].mxu0
  %v140 = vpop.f32.mrb[0].mxu0
  %v141 = vadd.f32 %v85, %v140
  %v142 = vpop.f32.mrb[0].mxu0
  %143 = vdwg.mxu0
  %v144 = vpack.c.bf16 %v141, %v138
  %v146 = vunpack.c.l.b16 %v144
  %v147 = vunpack.c.h.b16 %v144
  %v148 = vpack.c.b16 %v146, %v146
  %v149 = vpack.c.b16 %v147, %v147
  %vm152 = vcmask 781312
  %153 = vst.msk [vmem:[%s5] sm:$0xf] %vm152, %v148
  %154 = vst.msk [vmem:[%s5 + $0x4] sm:$0xf] %vm152, %v149
  // Predicated region
  $region26: #{encode_image.15} parent=0 // pred_check
    _
  $region27: #{encode_image.15} parent=0 // pred_check_branch
    %156 = sbr.rel (0) target = $region29
  $region28: #{encode_image.15} parent=0 // pred_region
    _
  $region29: #{encode_image.15} parent=0 // pred_fallthru
    _
  // Predicated region
  $region30: #{encode_image.15} parent=0 // pred_check
    _
  $region31: #{encode_image.15} parent=0 // pred_check_branch
    %158 = sbr.rel (0) target = $region33
  $region32: #{encode_image.15} parent=0 // pred_region
    _
  $region33: #{encode_image.15} parent=0 // pred_fallthru
    _

// kernel: encode_image.16
$region0: #{encode_image.16}
  #allocation0 [shape = 'u32[]', space=smem, size = 0x4, offset = 0x4, fixed_abs, tag = 'smem constant byte address 0x4 - core index']
  #allocation1 [shape = 'u32[144,128]{1,0:T(1,128)}', space=vmem, size = 0x12000, scoped, tag = 'internal scratch']
  #allocation2 [shape = 'f32[5,32]{1,0:T(8,128)}', space=vmem, size = 0x1000, scoped, tag = 'scratch operand']
  %s0 = inlined_call_operand.vmem [shape: bf16[2,5,96], index: 0, kind: input, shape index: {}]
  %s1 = inlined_call_operand.vmem [shape: bf16[2,5,32], index: 1, kind: output, shape index: {}]
  %s2 = sld [smem:[#allocation0]]
  $region37: #{encode_image.16} parent=0
    _
  %s4 = ssub.s32 1, %s2
  %s5 = scalar_select 0, %s4, %s2
  loop: start=0, step=1, limit=4
  $region2: #{encode_image.16} parent=0 // loop_pre_header
    _
  $region3: #{encode_image.16} parent=0 // loop_header
    %s7 = sphi 0, %s11
    %p8 = scmp.ge.s32.totalorder %s7, 4
    %s17 = sphi 0, %s19
    %s20 = sphi 0, %s17
    %s21 = sphi 0, %s20
    %s37 = sphi 0, %s21
    %s43 = sphi 0, %s45
    %s46 = sphi 0, %s43
    %s47 = sphi 0, %s46
    %s63 = sphi 0, %s47
  $region4: #{encode_image.16} parent=0 // loop_header_branch
    %10 = sbr.rel (%p8) target = $region8
  $region5: #{encode_image.16} parent=0 // loop_body
    %s12 = ssub.s32 %s7, 1
    %s13 = ssub.s32 %s7, 2
    %s14 = sadd.s32 %s7, 1
    %s15 = ssub.s32 %s7, %s14
    %p16 = scmp.eq.s32.totalorder %s15, 0
    %s18 = sadd.s32 %s17, 1
    %s19 = scalar_select %p16, %s17, %s18
    %p22 = pneg %p16
    %p23 = scmp.eq.s32.totalorder %s7, 1
    %p24 = por %p22, %p23
    %p25 = scmp.ne.s32.totalorder %s17, %s20
    %p26 = scmp.eq.s32.totalorder %s7, 0
    %p27 = por %p25, %p26
    %p28 = scmp.ne.s32.totalorder %s17, %s20
    %p29 = scmp.eq.s32.totalorder %s12, 1
    %p30 = por %p28, %p29
    %p31 = scmp.ne.s32.totalorder %s20, %s21
    %p32 = scmp.eq.s32.totalorder %s12, 0
    %p33 = por %p31, %p32
    %p34 = scmp.ne.s32.totalorder %s20, %s21
    %p35 = scmp.eq.s32.totalorder %s13, 1
    %p36 = por %p34, %p35
    %p38 = scmp.ne.s32.totalorder %s21, %s37
    %p39 = scmp.eq.s32.totalorder %s13, 0
    %p40 = por %p38, %p39
    %s41 = ssub.s32 %s7, %s14
    %p42 = scmp.eq.s32.totalorder %s41, 0
    %s44 = sadd.s32 %s43, 1
    %s45 = scalar_select %p42, %s43, %s44
    %p48 = pneg %p42
    %p49 = scmp.eq.s32.totalorder %s7, 1
    %p50 = por %p48, %p49
    %p51 = scmp.ne.s32.totalorder %s43, %s46
    %p52 = scmp.eq.s32.totalorder %s7, 0
    %p53 = por %p51, %p52
    %p54 = scmp.ne.s32.totalorder %s43, %s46
    %p55 = scmp.eq.s32.totalorder %s12, 1
    %p56 = por %p54, %p55
    %p57 = scmp.ne.s32.totalorder %s46, %s47
    %p58 = scmp.eq.s32.totalorder %s12, 0
    %p59 = por %p57, %p58
    %p60 = scmp.ne.s32.totalorder %s46, %s47
    %p61 = scmp.eq.s32.totalorder %s13, 1
    %p62 = por %p60, %p61
    %p64 = scmp.ne.s32.totalorder %s47, %s63
    %p65 = scmp.eq.s32.totalorder %s13, 0
    %p66 = por %p64, %p65
    %p67 = scmp.le.s32.totalorder 1, %s7
    %p68 = scmp.lt.s32.totalorder %s7, 3
    %p69 = pnand %p67, %p68
    %p70 = pneg %p69
    // Predicated region
    $region9: #{encode_image.16} parent=5 // pred_check
      _
    $region10: #{encode_image.16} parent=5 // pred_check_branch
      %72 = sbr.rel (%p69) target = $region12
    $region11: #{encode_image.16} parent=5 // pred_region
      %s73 = ssub.s32 %s7, 1
    $region12: #{encode_image.16} parent=5 // pred_fallthru
      _
    %p74 = scmp.lt.s32.totalorder %s7, 2
    // Predicated region
    $region13: #{encode_image.16} parent=5 // pred_check
      %p75 = pneg %p74
    $region14: #{encode_image.16} parent=5 // pred_check_branch
      %77 = sbr.rel (%p75) target = $region16
    $region15: #{encode_image.16} parent=5 // pred_region
      // Predicated region
      $region17: #{encode_image.16} parent=15 // pred_check
        %p78 = pneg %p27
      $region18: #{encode_image.16} parent=15 // pred_check_branch
        %80 = sbr.rel (%p78) target = $region20
      $region19: #{encode_image.16} parent=15 // pred_region
        %p81 = scmp.lt.s32.totalorder %s7, 1
        %s82 = scalar_select %p81, %s7, 1
        %s83 = smul.addr %s82, 4
        %s84 = scalar_lea.vmem %s0, %s83
      $region20: #{encode_image.16} parent=15 // pred_fallthru
        _
    $region16: #{encode_image.16} parent=5 // pred_fallthru
      _
    %p85 = scmp.le.s32.totalorder 1, %s7
    %p86 = scmp.lt.s32.totalorder %s7, 3
    %p87 = pnand %p85, %p86
    %p88 = pneg %p87
    // Predicated region
    $region21: #{encode_image.16} parent=5 // pred_check
      _
    $region22: #{encode_image.16} parent=5 // pred_check_branch
      %90 = sbr.rel (%p87) target = $region24
    $region23: #{encode_image.16} parent=5 // pred_region
      %s91 = ssub.s32 %s7, 1
      %p92 = scmp.lt.s32.totalorder %s12, 1
      %s93 = scalar_select %p92, %s12, 1
      %s94 = smul.addr %s93, 4
      %s95 = scalar_lea.vmem %s0, %s94
      %p96 = pneg %p33
      %p97 = pneg %p30
      %p98 = pneg %p59
      %p99 = pneg %p56
      %p100 = scmp.lt.s32.totalorder %s12, 1
      %s101 = scalar_select %p100, %s12, 1
      %s102 = smul.addr %s101, 4
      %s103 = scalar_lea.vmem %s1, %s102
      %p104 = scmp.lt.s32.totalorder %s12, 1
      %s105 = scalar_select %p104, %s12, 1
      %s106 = smul.addr %s105, 4
      %s107 = scalar_lea.vmem %s0, %s106
      %p108 = scmp.lt.s32.totalorder %s12, 1
      %s109 = scalar_select %p108, %s12, 1
      %s110 = smul.addr %s109, 4
      %s111 = scalar_lea.vmem %s1, %s110
      %v113 = vld [vmem:[%s107] sm:$0x7]
      %v115 = vunpack.c.l.b16 %v113
      %v116 = vpack.c.b16 %v115, %v115
      %117 = vrot.lane.b32.xlu0 %v116, 96
      %v118 = vpop.permute.xlu0 %117
      %vm119 = vcmask 64512
      %v121 = vsel %vm119, %v113, 0
      %v124 = vsel %vm119, %v118, 0
      %126 = vmatprep.subr.bf16.mxu0 0
      %127 = vmatpush1.bf16.xpose.msra.mxu0 %v124
      %128 = vmatprep.subr.bf16.mxu0 0
      %129 = vmatpush1.bf16.xpose.msra.mxu0 0
      %130 = vmatprep.subr.bf16.mxu0 0
      %131 = vmatpush1.bf16.xpose.msra.mxu0 0
      %132 = vmatprep.subr.bf16.mxu0 0
      %133 = vmatpush1.bf16.xpose.msra.mxu0 0
      %134 = vmatprep.subr.bf16.mxu0 0
      %135 = vmatpush1.bf16.xpose.msra.mxu0 0
      %136 = vmatprep.subr.bf16.mxu0 0
      %137 = vmatpush1.bf16.xpose.msra.mxu0 0
      %138 = vmatprep.subr.bf16.mxu0 0
      %139 = vmatpush1.bf16.xpose.msra.mxu0 0
      %140 = vmatprep.subr.bf16.mxu0 0
      %141 = vmatpush1.bf16.xpose.msra.mxu0 0
      %142 = vmatprep.subr.bf16.mxu0 0
      %143 = vmatpush1.bf16.xpose.msra.mxu0 0
      %144 = vmatprep.subr.bf16.mxu0 0
      %145 = vmatpush1.bf16.xpose.msra.mxu0 0
      %146 = vmatprep.subr.bf16.mxu0 0
      %147 = vmatpush1.bf16.xpose.msra.mxu0 0
      %148 = vmatprep.subr.bf16.mxu0 0
      %149 = vmatpush1.bf16.xpose.msra.mxu0 0
      %150 = vmatprep.subr.bf16.mxu0 0
      %151 = vmatpush1.bf16.xpose.msra.mxu0 0
      %152 = vmatprep.subr.bf16.mxu0 0
      %153 = vmatpush1.bf16.xpose.msra.mxu0 0
      %154 = vmatprep.subr.bf16.mxu0 0
      %155 = vmatpush1.bf16.xpose.msra.mxu0 0
      %156 = vmatprep.subr.bf16.mxu0 0
      %157 = vmatpush1.bf16.xpose.msra.mxu0 0
      %158 = vmatprep.mubr.bf16.mxu0 0
      %159 = vmatmul.mubr.bf16.gmra.mrb[0].mxu0 %v121
      %v160 = vpop.f32.mrb[0].mxu0
      %v161 = vadd.f32 0.0, %v160
      %v162 = vpop.f32.mrb[0].mxu0
      %v163 = vpop.f32.mrb[0].mxu0
      %v164 = vpop.f32.mrb[0].mxu0
      %165 = vdwg.mxu0
      %vm166 = vcmask 36864
      %v167 = vsel %vm166, %v161, -inf
      %168 = vmax.xlane.f32.xlu0 %v167
      %v169 = vpop.xlane.xlu0 %168
      %v170 = vsub.f32 %v161, %v169
      %v171 = vmul.f32 %v170, 1.442695
      %v172 = vpow.pop %v171
      %v173 = vsel %vm166, %v172, 0.0
      %174 = vadd.xlane.f32.xlu0 %v173
      %v175 = vpop.xlane.xlu0 %174
      %v176 = vrcp.pop %v175
      %v177 = vmul.f32 %v172, %v176
      %v178 = vpack.c.bf16 %v177, %v177
      %179 = vrot.lane.b32.xlu0 %v116, 64
      %v180 = vpop.permute.xlu0 %179
      %vm181 = vcmask 39936
      %v183 = vsel %vm181, %v178, 0
      %vm185 = vcmask 1041408
      %vm186 = vcmask 1042432
      %v187 = vsel %vm185, 4294967295, 65535
      %v188 = vsel %vm186, %v187, 0
      %v190 = vand.u32 %v180, %v188
      %192 = vmatprep.subr.bf16.mxu0 0
      %193 = vmatpush1.bf16.msra.mxu0 %v190
      %194 = vmatprep.subr.bf16.mxu0 0
      %195 = vmatpush1.bf16.msra.mxu0 0
      %196 = vmatprep.subr.bf16.mxu0 0
      %197 = vmatpush1.bf16.msra.mxu0 0
      %198 = vmatprep.subr.bf16.mxu0 0
      %199 = vmatpush1.bf16.msra.mxu0 0
      %200 = vmatprep.subr.bf16.mxu0 0
      %201 = vmatpush1.bf16.msra.mxu0 0
      %202 = vmatprep.subr.bf16.mxu0 0
      %203 = vmatpush1.bf16.msra.mxu0 0
      %204 = vmatprep.subr.bf16.mxu0 0
      %205 = vmatpush1.bf16.msra.mxu0 0
      %206 = vmatprep.subr.bf16.mxu0 0
      %207 = vmatpush1.bf16.msra.mxu0 0
      %208 = vmatprep.subr.bf16.mxu0 0
      %209 = vmatpush1.bf16.msra.mxu0 0
      %210 = vmatprep.subr.bf16.mxu0 0
      %211 = vmatpush1.bf16.msra.mxu0 0
      %212 = vmatprep.subr.bf16.mxu0 0
      %213 = vmatpush1.bf16.msra.mxu0 0
      %214 = vmatprep.subr.bf16.mxu0 0
      %215 = vmatpush1.bf16.msra.mxu0 0
      %216 = vmatprep.subr.bf16.mxu0 0
      %217 = vmatpush1.bf16.msra.mxu0 0
      %218 = vmatprep.subr.bf16.mxu0 0
      %219 = vmatpush1.bf16.msra.mxu0 0
      %220 = vmatprep.subr.bf16.mxu0 0
      %221 = vmatpush1.bf16.msra.mxu0 0
      %222 = vmatprep.subr.bf16.mxu0 0
      %223 = vmatpush1.bf16.msra.mxu0 0
      %224 = vmatprep.mubr.bf16.mxu0 0
      %225 = vmatmul.mubr.bf16.gmra.mrb[0].mxu0 %v183
      %v226 = vpop.f32.mrb[0].mxu0
      %v227 = vadd.f32 0.0, %v226
      %v228 = vpop.f32.mrb[0].mxu0
      %v229 = vpop.f32.mrb[0].mxu0
      %v230 = vpop.f32.mrb[0].mxu0
      %231 = vdwg.mxu0
      %vm232 = vcmask 61440
      %233 = vst.msk [vmem:[#allocation2] sm:$0x1f] %vm232, %v227
      %234 = vrot.lane.b32.xlu0 %v116, 120
      %v235 = vpop.permute.xlu0 %234
      %236 = vrot.lane.b32.xlu0 %v116, 88
      %v237 = vpop.permute.xlu0 %236
      %v239 = vsel %vm119, %v235, 0
      %v242 = vsel %vm119, %v237, 0
      %244 = vmatprep.subr.bf16.mxu0 0
      %245 = vmatpush1.bf16.xpose.msra.mxu0 %v242
      %246 = vmatprep.subr.bf16.mxu0 0
      %247 = vmatpush1.bf16.xpose.msra.mxu0 0
      %248 = vmatprep.subr.bf16.mxu0 0
      %249 = vmatpush1.bf16.xpose.msra.mxu0 0
      %250 = vmatprep.subr.bf16.mxu0 0
      %251 = vmatpush1.bf16.xpose.msra.mxu0 0
      %252 = vmatprep.subr.bf16.mxu0 0
      %253 = vmatpush1.bf16.xpose.msra.mxu0 0
      %254 = vmatprep.subr.bf16.mxu0 0
      %255 = vmatpush1.bf16.xpose.msra.mxu0 0
      %256 = vmatprep.subr.bf16.mxu0 0
      %257 = vmatpush1.bf16.xpose.msra.mxu0 0
      %258 = vmatprep.subr.bf16.mxu0 0
      %259 = vmatpush1.bf16.xpose.msra.mxu0 0
      %260 = vmatprep.subr.bf16.mxu0 0
      %261 = vmatpush1.bf16.xpose.msra.mxu0 0
      %262 = vmatprep.subr.bf16.mxu0 0
      %263 = vmatpush1.bf16.xpose.msra.mxu0 0
      %264 = vmatprep.subr.bf16.mxu0 0
      %265 = vmatpush1.bf16.xpose.msra.mxu0 0
      %266 = vmatprep.subr.bf16.mxu0 0
      %267 = vmatpush1.bf16.xpose.msra.mxu0 0
      %268 = vmatprep.subr.bf16.mxu0 0
      %269 = vmatpush1.bf16.xpose.msra.mxu0 0
      %270 = vmatprep.subr.bf16.mxu0 0
      %271 = vmatpush1.bf16.xpose.msra.mxu0 0
      %272 = vmatprep.subr.bf16.mxu0 0
      %273 = vmatpush1.bf16.xpose.msra.mxu0 0
      %274 = vmatprep.subr.bf16.mxu0 0
      %275 = vmatpush1.bf16.xpose.msra.mxu0 0
      %276 = vmatprep.mubr.bf16.mxu0 0
      %277 = vmatmul.mubr.bf16.gmra.mrb[0].mxu0 %v239
      %v278 = vpop.f32.mrb[0].mxu0
      %v279 = vadd.f32 0.0, %v278
      %v280 = vpop.f32.mrb[0].mxu0
      %v281 = vpop.f32.mrb[0].mxu0
      %v282 = vpop.f32.mrb[0].mxu0
      %283 = vdwg.mxu0
      %v284 = vsel %vm166, %v279, -inf
      %285 = vmax.xlane.f32.xlu0 %v284
      %v286 = vpop.xlane.xlu0 %285
      %v287 = vsub.f32 %v279, %v286
      %v288 = vmul.f32 %v287, 1.442695
      %v289 = vpow.pop %v288
      %v290 = vsel %vm166, %v289, 0.0
      %291 = vadd.xlane.f32.xlu0 %v290
      %v292 = vpop.xlane.xlu0 %291
      %v293 = vrcp.pop %v292
      %v294 = vmul.f32 %v289, %v293
      %v295 = vpack.c.bf16 %v294, %v294
      %296 = vrot.lane.b32.xlu0 %v116, 56
      %v297 = vpop.permute.xlu0 %296
      %v299 = vsel %vm181, %v295, 0
      %v302 = vand.u32 %v297, %v188
      %304 = vmatprep.subr.bf16.mxu0 0
      %305 = vmatpush1.bf16.msra.mxu0 %v302
      %306 = vmatprep.subr.bf16.mxu0 0
      %307 = vmatpush1.bf16.msra.mxu0 0
      %308 = vmatprep.subr.bf16.mxu0 0
      %309 = vmatpush1.bf16.msra.mxu0 0
      %310 = vmatprep.subr.bf16.mxu0 0
      %311 = vmatpush1.bf16.msra.mxu0 0
      %312 = vmatprep.subr.bf16.mxu0 0
      %313 = vmatpush1.bf16.msra.mxu0 0
      %314 = vmatprep.subr.bf16.mxu0 0
      %315 = vmatpush1.bf16.msra.mxu0 0
      %316 = vmatprep.subr.bf16.mxu0 0
      %317 = vmatpush1.bf16.msra.mxu0 0
      %318 = vmatprep.subr.bf16.mxu0 0
      %319 = vmatpush1.bf16.msra.mxu0 0
      %320 = vmatprep.subr.bf16.mxu0 0
      %321 = vmatpush1.bf16.msra.mxu0 0
      %322 = vmatprep.subr.bf16.mxu0 0
      %323 = vmatpush1.bf16.msra.mxu0 0
      %324 = vmatprep.subr.bf16.mxu0 0
      %325 = vmatpush1.bf16.msra.mxu0 0
      %326 = vmatprep.subr.bf16.mxu0 0
      %327 = vmatpush1.bf16.msra.mxu0 0
      %328 = vmatprep.subr.bf16.mxu0 0
      %329 = vmatpush1.bf16.msra.mxu0 0
      %330 = vmatprep.subr.bf16.mxu0 0
      %331 = vmatpush1.bf16.msra.mxu0 0
      %332 = vmatprep.subr.bf16.mxu0 0
      %333 = vmatpush1.bf16.msra.mxu0 0
      %334 = vmatprep.subr.bf16.mxu0 0
      %335 = vmatpush1.bf16.msra.mxu0 0
      %336 = vmatprep.mubr.bf16.mxu0 0
      %337 = vmatmul.mubr.bf16.gmra.mrb[0].mxu0 %v299
      %v338 = vpop.f32.mrb[0].mxu0
      %v339 = vadd.f32 0.0, %v338
      %v340 = vpop.f32.mrb[0].mxu0
      %v341 = vpop.f32.mrb[0].mxu0
      %v342 = vpop.f32.mrb[0].mxu0
      %343 = vdwg.mxu0
      %345 = vrot.lane.b32.xlu0 %v339, 8
      %v346 = vpop.permute.xlu0 %345
      %vm348 = vcmask 127040
      %349 = vst.msk [vmem:[#allocation2] sm:$0x1f] %vm348, %v346
      %350 = vrot.lane.b32.xlu0 %v116, 112
      %v351 = vpop.permute.xlu0 %350
      %352 = vrot.lane.b32.xlu0 %v116, 80
      %v353 = vpop.permute.xlu0 %352
      %v355 = vsel %vm119, %v351, 0
      %v358 = vsel %vm119, %v353, 0
      %360 = vmatprep.subr.bf16.mxu0 0
      %361 = vmatpush1.bf16.xpose.msra.mxu0 %v358
      %362 = vmatprep.subr.bf16.mxu0 0
      %363 = vmatpush1.bf16.xpose.msra.mxu0 0
      %364 = vmatprep.subr.bf16.mxu0 0
      %365 = vmatpush1.bf16.xpose.msra.mxu0 0
      %366 = vmatprep.subr.bf16.mxu0 0
      %367 = vmatpush1.bf16.xpose.msra.mxu0 0
      %368 = vmatprep.subr.bf16.mxu0 0
      %369 = vmatpush1.bf16.xpose.msra.mxu0 0
      %370 = vmatprep.subr.bf16.mxu0 0
      %371 = vmatpush1.bf16.xpose.msra.mxu0 0
      %372 = vmatprep.subr.bf16.mxu0 0
      %373 = vmatpush1.bf16.xpose.msra.mxu0 0
      %374 = vmatprep.subr.bf16.mxu0 0
      %375 = vmatpush1.bf16.xpose.msra.mxu0 0
      %376 = vmatprep.subr.bf16.mxu0 0
      %377 = vmatpush1.bf16.xpose.msra.mxu0 0
      %378 = vmatprep.subr.bf16.mxu0 0
      %379 = vmatpush1.bf16.xpose.msra.mxu0 0
      %380 = vmatprep.subr.bf16.mxu0 0
      %381 = vmatpush1.bf16.xpose.msra.mxu0 0
      %382 = vmatprep.subr.bf16.mxu0 0
      %383 = vmatpush1.bf16.xpose.msra.mxu0 0
      %384 = vmatprep.subr.bf16.mxu0 0
      %385 = vmatpush1.bf16.xpose.msra.mxu0 0
      %386 = vmatprep.subr.bf16.mxu0 0
      %387 = vmatpush1.bf16.xpose.msra.mxu0 0
      %388 = vmatprep.subr.bf16.mxu0 0
      %389 = vmatpush1.bf16.xpose.msra.mxu0 0
      %390 = vmatprep.subr.bf16.mxu0 0
      %391 = vmatpush1.bf16.xpose.msra.mxu0 0
      %392 = vmatprep.mubr.bf16.mxu0 0
      %393 = vmatmul.mubr.bf16.gmra.mrb[0].mxu0 %v355
      %v394 = vpop.f32.mrb[0].mxu0
      %v395 = vadd.f32 0.0, %v394
      %v396 = vpop.f32.mrb[0].mxu0
      %v397 = vpop.f32.mrb[0].mxu0
      %v398 = vpop.f32.mrb[0].mxu0
      %399 = vdwg.mxu0
      %v400 = vsel %vm166, %v395, -inf
      %401 = vmax.xlane.f32.xlu0 %v400
      %v402 = vpop.xlane.xlu0 %401
      %v403 = vsub.f32 %v395, %v402
      %v404 = vmul.f32 %v403, 1.442695
      %v405 = vpow.pop %v404
      %v406 = vsel %vm166, %v405, 0.0
      %407 = vadd.xlane.f32.xlu0 %v406
      %v408 = vpop.xlane.xlu0 %407
      %v409 = vrcp.pop %v408
      %v410 = vmul.f32 %v405, %v409
      %v411 = vpack.c.bf16 %v410, %v410
      %412 = vrot.lane.b32.xlu0 %v116, 48
      %v413 = vpop.permute.xlu0 %412
      %v415 = vsel %vm181, %v411, 0
      %v418 = vand.u32 %v413, %v188
      %420 = vmatprep.subr.bf16.mxu0 0
      %421 = vmatpush1.bf16.msra.mxu0 %v418
      %422 = vmatprep.subr.bf16.mxu0 0
      %423 = vmatpush1.bf16.msra.mxu0 0
      %424 = vmatprep.subr.bf16.mxu0 0
      %425 = vmatpush1.bf16.msra.mxu0 0
      %426 = vmatprep.subr.bf16.mxu0 0
      %427 = vmatpush1.bf16.msra.mxu0 0
      %428 = vmatprep.subr.bf16.mxu0 0
      %429 = vmatpush1.bf16.msra.mxu0 0
      %430 = vmatprep.subr.bf16.mxu0 0
      %431 = vmatpush1.bf16.msra.mxu0 0
      %432 = vmatprep.subr.bf16.mxu0 0
      %433 = vmatpush1.bf16.msra.mxu0 0
      %434 = vmatprep.subr.bf16.mxu0 0
      %435 = vmatpush1.bf16.msra.mxu0 0
      %436 = vmatprep.subr.bf16.mxu0 0
      %437 = vmatpush1.bf16.msra.mxu0 0
      %438 = vmatprep.subr.bf16.mxu0 0
      %439 = vmatpush1.bf16.msra.mxu0 0
      %440 = vmatprep.subr.bf16.mxu0 0
      %441 = vmatpush1.bf16.msra.mxu0 0
      %442 = vmatprep.subr.bf16.mxu0 0
      %443 = vmatpush1.bf16.msra.mxu0 0
      %444 = vmatprep.subr.bf16.mxu0 0
      %445 = vmatpush1.bf16.msra.mxu0 0
      %446 = vmatprep.subr.bf16.mxu0 0
      %447 = vmatpush1.bf16.msra.mxu0 0
      %448 = vmatprep.subr.bf16.mxu0 0
      %449 = vmatpush1.bf16.msra.mxu0 0
      %450 = vmatprep.subr.bf16.mxu0 0
      %451 = vmatpush1.bf16.msra.mxu0 0
      %452 = vmatprep.mubr.bf16.mxu0 0
      %453 = vmatmul.mubr.bf16.gmra.mrb[0].mxu0 %v415
      %v454 = vpop.f32.mrb[0].mxu0
      %v455 = vadd.f32 0.0, %v454
      %v456 = vpop.f32.mrb[0].mxu0
      %v457 = vpop.f32.mrb[0].mxu0
      %v458 = vpop.f32.mrb[0].mxu0
      %459 = vdwg.mxu0
      %461 = vrot.lane.b32.xlu0 %v455, 16
      %v462 = vpop.permute.xlu0 %461
      %vm464 = vcmask 192640
      %465 = vst.msk [vmem:[#allocation2] sm:$0x1f] %vm464, %v462
      %466 = vrot.lane.b32.xlu0 %v116, 104
      %v467 = vpop.permute.xlu0 %466
      %468 = vrot.lane.b32.xlu0 %v116, 72
      %v469 = vpop.permute.xlu0 %468
      %v471 = vsel %vm119, %v467, 0
      %v474 = vsel %vm119, %v469, 0
      %476 = vmatprep.subr.bf16.mxu0 0
      %477 = vmatpush1.bf16.xpose.msra.mxu0 %v474
      %478 = vmatprep.subr.bf16.mxu0 0
      %479 = vmatpush1.bf16.xpose.msra.mxu0 0
      %480 = vmatprep.subr.bf16.mxu0 0
      %481 = vmatpush1.bf16.xpose.msra.mxu0 0
      %482 = vmatprep.subr.bf16.mxu0 0
      %483 = vmatpush1.bf16.xpose.msra.mxu0 0
      %484 = vmatprep.subr.bf16.mxu0 0
      %485 = vmatpush1.bf16.xpose.msra.mxu0 0
      %486 = vmatprep.subr.bf16.mxu0 0
      %487 = vmatpush1.bf16.xpose.msra.mxu0 0
      %488 = vmatprep.subr.bf16.mxu0 0
      %489 = vmatpush1.bf16.xpose.msra.mxu0 0
      %490 = vmatprep.subr.bf16.mxu0 0
      %491 = vmatpush1.bf16.xpose.msra.mxu0 0
      %492 = vmatprep.subr.bf16.mxu0 0
      %493 = vmatpush1.bf16.xpose.msra.mxu0 0
      %494 = vmatprep.subr.bf16.mxu0 0
      %495 = vmatpush1.bf16.xpose.msra.mxu0 0
      %496 = vmatprep.subr.bf16.mxu0 0
      %497 = vmatpush1.bf16.xpose.msra.mxu0 0
      %498 = vmatprep.subr.bf16.mxu0 0
      %499 = vmatpush1.bf16.xpose.msra.mxu0 0
      %500 = vmatprep.subr.bf16.mxu0 0
      %501 = vmatpush1.bf16.xpose.msra.mxu0 0
      %502 = vmatprep.subr.bf16.mxu0 0
      %503 = vmatpush1.bf16.xpose.msra.mxu0 0
      %504 = vmatprep.subr.bf16.mxu0 0
      %505 = vmatpush1.bf16.xpose.msra.mxu0 0
      %506 = vmatprep.subr.bf16.mxu0 0
      %507 = vmatpush1.bf16.xpose.msra.mxu0 0
      %508 = vmatprep.mubr.bf16.mxu0 0
      %509 = vmatmul.mubr.bf16.gmra.mrb[0].mxu0 %v471
      %v510 = vpop.f32.mrb[0].mxu0
      %v511 = vadd.f32 0.0, %v510
      %v512 = vpop.f32.mrb[0].mxu0
      %v513 = vpop.f32.mrb[0].mxu0
      %v514 = vpop.f32.mrb[0].mxu0
      %515 = vdwg.mxu0
      %v516 = vsel %vm166, %v511, -inf
      %517 = vmax.xlane.f32.xlu0 %v516
      %v518 = vpop.xlane.xlu0 %517
      %v519 = vsub.f32 %v511, %v518
      %v520 = vmul.f32 %v519, 1.442695
      %v521 = vpow.pop %v520
      %v522 = vsel %vm166, %v521, 0.0
      %523 = vadd.xlane.f32.xlu0 %v522
      %v524 = vpop.xlane.xlu0 %523
      %v525 = vrcp.pop %v524
      %v526 = vmul.f32 %v521, %v525
      %v527 = vpack.c.bf16 %v526, %v526
      %528 = vrot.lane.b32.xlu0 %v116, 40
      %v529 = vpop.permute.xlu0 %528
      %v531 = vsel %vm181, %v527, 0
      %v534 = vand.u32 %v529, %v188
      %536 = vmatprep.subr.bf16.mxu0 0
      %537 = vmatpush1.bf16.msra.mxu0 %v534
      %538 = vmatprep.subr.bf16.mxu0 0
      %539 = vmatpush1.bf16.msra.mxu0 0
      %540 = vmatprep.subr.bf16.mxu0 0
      %541 = vmatpush1.bf16.msra.mxu0 0
      %542 = vmatprep.subr.bf16.mxu0 0
      %543 = vmatpush1.bf16.msra.mxu0 0
      %544 = vmatprep.subr.bf16.mxu0 0
      %545 = vmatpush1.bf16.msra.mxu0 0
      %546 = vmatprep.subr.bf16.mxu0 0
      %547 = vmatpush1.bf16.msra.mxu0 0
      %548 = vmatprep.subr.bf16.mxu0 0
      %549 = vmatpush1.bf16.msra.mxu0 0
      %550 = vmatprep.subr.bf16.mxu0 0
      %551 = vmatpush1.bf16.msra.mxu0 0
      %552 = vmatprep.subr.bf16.mxu0 0
      %553 = vmatpush1.bf16.msra.mxu0 0
      %554 = vmatprep.subr.bf16.mxu0 0
      %555 = vmatpush1.bf16.msra.mxu0 0
      %556 = vmatprep.subr.bf16.mxu0 0
      %557 = vmatpush1.bf16.msra.mxu0 0
      %558 = vmatprep.subr.bf16.mxu0 0
      %559 = vmatpush1.bf16.msra.mxu0 0
      %560 = vmatprep.subr.bf16.mxu0 0
      %561 = vmatpush1.bf16.msra.mxu0 0
      %562 = vmatprep.subr.bf16.mxu0 0
      %563 = vmatpush1.bf16.msra.mxu0 0
      %564 = vmatprep.subr.bf16.mxu0 0
      %565 = vmatpush1.bf16.msra.mxu0 0
      %566 = vmatprep.subr.bf16.mxu0 0
      %567 = vmatpush1.bf16.msra.mxu0 0
      %568 = vmatprep.mubr.bf16.mxu0 0
      %569 = vmatmul.mubr.bf16.gmra.mrb[0].mxu0 %v531
      %v570 = vpop.f32.mrb[0].mxu0
      %v571 = vadd.f32 0.0, %v570
      %v572 = vpop.f32.mrb[0].mxu0
      %v573 = vpop.f32.mrb[0].mxu0
      %v574 = vpop.f32.mrb[0].mxu0
      %575 = vdwg.mxu0
      %577 = vrot.lane.b32.xlu0 %v571, 24
      %v578 = vpop.permute.xlu0 %577
      %vm580 = vcmask 258240
      %581 = vst.msk [vmem:[#allocation2] sm:$0x1f] %vm580, %v578
      %v582 = vld [vmem:[#allocation2] sm:$0x1f]
      %v583 = vpack.c.bf16 %v582, %v582
      %vm584 = vcmask 256000
      %vm585 = vsmask.f32 2304
      %vm586 = vmand %vm584, %vm585
      %v587 = vld [vmem:[%s111] sm:$0x7]
      %v588 = vsel %vm586, %v583, %v587
      %589 = vst [vmem:[%s111] sm:$0x7] %v588
      %p590 = scmp.lt.s32.totalorder %s12, 1
      %s591 = scalar_select %p590, %s12, 1
      %s592 = smul.addr %s591, 4
      %s593 = scalar_lea.vmem %s1, %s592
      // Predicated region
      $region25: #{encode_image.16} parent=23 // pred_check
        %p594 = pneg %p56
      $region26: #{encode_image.16} parent=23 // pred_check_branch
        %596 = sbr.rel (%p594) target = $region28
      $region27: #{encode_image.16} parent=23 // pred_region
        _
      $region28: #{encode_image.16} parent=23 // pred_fallthru
        _
    $region24: #{encode_image.16} parent=5 // pred_fallthru
      _
    %p597 = scmp.le.s32.totalorder 2, %s7
    // Predicated region
    $region29: #{encode_image.16} parent=5 // pred_check
      %p598 = pneg %p597
    $region30: #{encode_image.16} parent=5 // pred_check_branch
      %600 = sbr.rel (%p598) target = $region32
    $region31: #{encode_image.16} parent=5 // pred_region
      %s601 = ssub.s32 %s7, 2
      // Predicated region
      $region33: #{encode_image.16} parent=31 // pred_check
        %p602 = pneg %p62
      $region34: #{encode_image.16} parent=31 // pred_check_branch
        %604 = sbr.rel (%p602) target = $region36
      $region35: #{encode_image.16} parent=31 // pred_region
        %p605 = scmp.lt.s32.totalorder %s13, 1
        %s606 = scalar_select %p605, %s13, 1
        %s607 = smul.addr %s606, 4
        %s608 = scalar_lea.vmem %s1, %s607
      $region36: #{encode_image.16} parent=31 // pred_fallthru
        _
    $region32: #{encode_image.16} parent=5 // pred_fallthru
      _
  $region6: #{encode_image.16} parent=0 // loop_footer
    %s11 = sadd.s32 1, %s7
  $region7: #{encode_image.16} parent=0 // loop_footer_branch
    %6 = sbr.rel target = $region3
  $region8: #{encode_image.16} parent=0 // loop_exit
    _

// kernel: encode_image.17
$region0: #{encode_image.17}
  #allocation0 [shape = 'u32[]', space=smem, size = 0x4, offset = 0x4, fixed_abs, tag = 'smem constant byte address 0x4 - core index']
  #allocation1 [shape = 'u32[144,128]{1,0:T(1,128)}', space=vmem, size = 0x12000, scoped, tag = 'internal scratch']
  %s0 = inlined_call_operand.vmem [shape: bf16[16,32], index: 0, kind: input, shape index: {}]
  %s1 = inlined_call_operand.vmem [shape: bf16[32,32], index: 1, kind: input, shape index: {}]
  %s2 = inlined_call_operand.vmem [shape: f32[1,32], index: 2, kind: input, shape index: {}]
  %s3 = inlined_call_operand.vmem [shape: f32[16,32], index: 3, kind: input, shape index: {}]
  %s4 = inlined_call_operand.vmem [shape: f32[16,32], index: 4, kind: output, shape index: {}]
  %s5 = sld [smem:[#allocation0]]
  $region26: #{encode_image.17} parent=0
    _
  %s7 = ssub.s32 1, %s5
  %s8 = scalar_select 0, %s7, %s5
  // Predicated region
  $region2: #{encode_image.17} parent=0 // pred_check
    _
  $region3: #{encode_image.17} parent=0 // pred_check_branch
    %10 = sbr.rel (0) target = $region5
  $region4: #{encode_image.17} parent=0 // pred_region
    _
  $region5: #{encode_image.17} parent=0 // pred_fallthru
    _
  // Predicated region
  $region6: #{encode_image.17} parent=0 // pred_check
    _
  $region7: #{encode_image.17} parent=0 // pred_check_branch
    %12 = sbr.rel (0) target = $region9
  $region8: #{encode_image.17} parent=0 // pred_region
    _
  $region9: #{encode_image.17} parent=0 // pred_fallthru
    _
  // Predicated region
  $region10: #{encode_image.17} parent=0 // pred_check
    _
  $region11: #{encode_image.17} parent=0 // pred_check_branch
    %14 = sbr.rel (0) target = $region13
  $region12: #{encode_image.17} parent=0 // pred_region
    _
  $region13: #{encode_image.17} parent=0 // pred_fallthru
    _
  // Predicated region
  $region14: #{encode_image.17} parent=0 // pred_check
    _
  $region15: #{encode_image.17} parent=0 // pred_check_branch
    %16 = sbr.rel (0) target = $region17
  $region16: #{encode_image.17} parent=0 // pred_region
    _
  $region17: #{encode_image.17} parent=0 // pred_fallthru
    _
  %v18 = vld [vmem:[%s0] sm:$0xf]
  %v19 = vld [vmem:[%s0 + $0x4] sm:$0xf]
  %v20 = vld [vmem:[%s1] sm:$0xf]
  %v21 = vld [vmem:[%s1 + $0x4] sm:$0xf]
  %v22 = vld [vmem:[%s1 + $0x8] sm:$0xf]
  %v23 = vld [vmem:[%s1 + $0xc] sm:$0xf]
  %v24 = vld [vmem:[%s2] sm:$0x1]
  %v26 = vlaneseq
  %v27 = vshrl.u32 %v26, 7
  %v28 = vsub.s32 0, %v27
  %v29 = vrot.slane %v24, %v28
  %v33 = vunpack.c.l.b16 %v18
  %v34 = vunpack.c.l.b16 %v19
  %v35 = vpack.c.b16 %v34, %v33
  %v40 = vunpack.c.l.b16 %v20
  %v41 = vunpack.c.l.b16 %v21
  %v42 = vunpack.c.l.b16 %v22
  %v43 = vunpack.c.l.b16 %v23
  %v44 = vpack.c.b16 %v41, %v40
  %v45 = vpack.c.b16 %v43, %v42
  %vm48 = vcmask 261120
  %v50 = vsel %vm48, %v35, 0
  %52 = vmatprep.subr.bf16.mxu0 0
  %53 = vmatpush1.bf16.msra.mxu0 %v44
  %54 = vmatprep.subr.bf16.mxu0 0
  %55 = vmatpush1.bf16.msra.mxu0 %v45
  %56 = vmatprep.subr.bf16.mxu0 0
  %57 = vmatpush1.bf16.msra.mxu0 0
  %58 = vmatprep.subr.bf16.mxu0 0
  %59 = vmatpush1.bf16.msra.mxu0 0
  %60 = vmatprep.subr.bf16.mxu0 0
  %61 = vmatpush1.bf16.msra.mxu0 0
  %62 = vmatprep.subr.bf16.mxu0 0
  %63 = vmatpush1.bf16.msra.mxu0 0
  %64 = vmatprep.subr.bf16.mxu0 0
  %65 = vmatpush1.bf16.msra.mxu0 0
  %66 = vmatprep.subr.bf16.mxu0 0
  %67 = vmatpush1.bf16.msra.mxu0 0
  %68 = vmatprep.subr.bf16.mxu0 0
  %69 = vmatpush1.bf16.msra.mxu0 0
  %70 = vmatprep.subr.bf16.mxu0 0
  %71 = vmatpush1.bf16.msra.mxu0 0
  %72 = vmatprep.subr.bf16.mxu0 0
  %73 = vmatpush1.bf16.msra.mxu0 0
  %74 = vmatprep.subr.bf16.mxu0 0
  %75 = vmatpush1.bf16.msra.mxu0 0
  %76 = vmatprep.subr.bf16.mxu0 0
  %77 = vmatpush1.bf16.msra.mxu0 0
  %78 = vmatprep.subr.bf16.mxu0 0
  %79 = vmatpush1.bf16.msra.mxu0 0
  %80 = vmatprep.subr.bf16.mxu0 0
  %81 = vmatpush1.bf16.msra.mxu0 0
  %82 = vmatprep.subr.bf16.mxu0 0
  %83 = vmatpush1.bf16.msra.mxu0 0
  %84 = vmatprep.mubr.bf16.mxu0 0
  %85 = vmatmul.mubr.bf16.gmra.mrb[0].mxu0 %v50
  %v86 = vpop.f32.mrb[0].mxu0
  %v87 = vadd.f32 %v29, %v86
  %v88 = vpop.f32.mrb[0].mxu0
  %v89 = vpop.f32.mrb[0].mxu0
  %v90 = vadd.f32 %v29, %v89
  %v91 = vpop.f32.mrb[0].mxu0
  %92 = vdwg.mxu0
  %v93 = vld [vmem:[%s3] sm:$0xff]
  %v94 = vld [vmem:[%s3 + $0x8] sm:$0xff]
  %v95 = vadd.f32 %v87, %v93
  %v96 = vadd.f32 %v90, %v94
  %97 = vst.msk [vmem:[%s4] sm:$0xff] %vm48, %v95
  %98 = vst.msk [vmem:[%s4 + $0x8] sm:$0xff] %vm48, %v96
  // Predicated region
  $region18: #{encode_image.17} parent=0 // pred_check
    _
  $region19: #{encode_image.17} parent=0 // pred_check_branch
    %100 = sbr.rel (0) target = $region21
  $region20: #{encode_image.17} parent=0 // pred_region
    _
  $region21: #{encode_image.17} parent=0 // pred_fallthru
    _
  // Predicated region
  $region22: #{encode_image.17} parent=0 // pred_check
    _
  $region23: #{encode_image.17} parent=0 // pred_check_branch
    %102 = sbr.rel (0) target = $region25
  $region24: #{encode_image.17} parent=0 // pred_region
    _
  $region25: #{encode_image.17} parent=0 // pred_fallthru
    _

// kernel: encode_image.18
$region0: #{encode_image.18}
  #allocation0 [shape = 'u32[]', space=smem, size = 0x4, offset = 0x4, fixed_abs, tag = 'smem constant byte address 0x4 - core index']
  #allocation1 [shape = 'u32[144,128]{1,0:T(1,128)}', space=vmem, size = 0x12000, scoped, tag = 'internal scratch']
  #allocation2 [shape = 'bf16[16,32]{1,0:T(16,128)(2,1)}', space=vmem, size = 0x1000, scoped, tag = 'scratch operand']
  %s0 = inlined_call_operand.vmem [shape: f32[16,32], index: 0, kind: input, shape index: {}]
  %s1 = inlined_call_operand.vmem [shape: bf16[32,128], index: 1, kind: input, shape index: {}]
  %s2 = inlined_call_operand.vmem [shape: f32[1,128], index: 2, kind: input, shape index: {}]
  %s3 = inlined_call_operand.vmem [shape: f32[1,32], index: 3, kind: input, shape index: {}]
  %s4 = inlined_call_operand.vmem [shape: f32[1,32], index: 4, kind: input, shape index: {}]
  %s5 = inlined_call_operand.vmem [shape: bf16[16,128], index: 5, kind: output, shape index: {}]
  %s6 = sld [smem:[#allocation0]]
  $region34: #{encode_image.18} parent=0
    _
  %s8 = ssub.s32 1, %s6
  %s9 = scalar_select 0, %s8, %s6
  // Predicated region
  $region2: #{encode_image.18} parent=0 // pred_check
    _
  $region3: #{encode_image.18} parent=0 // pred_check_branch
    %11 = sbr.rel (0) target = $region5
  $region4: #{encode_image.18} parent=0 // pred_region
    _
  $region5: #{encode_image.18} parent=0 // pred_fallthru
    _
  // Predicated region
  $region6: #{encode_image.18} parent=0 // pred_check
    _
  $region7: #{encode_image.18} parent=0 // pred_check_branch
    %13 = sbr.rel (0) target = $region9
  $region8: #{encode_image.18} parent=0 // pred_region
    _
  $region9: #{encode_image.18} parent=0 // pred_fallthru
    _
  // Predicated region
  $region10: #{encode_image.18} parent=0 // pred_check
    _
  $region11: #{encode_image.18} parent=0 // pred_check_branch
    %15 = sbr.rel (0) target = $region13
  $region12: #{encode_image.18} parent=0 // pred_region
    _
  $region13: #{encode_image.18} parent=0 // pred_fallthru
    _
  // Predicated region
  $region14: #{encode_image.18} parent=0 // pred_check
    _
  $region15: #{encode_image.18} parent=0 // pred_check_branch
    %17 = sbr.rel (0) target = $region17
  $region16: #{encode_image.18} parent=0 // pred_region
    _
  $region17: #{encode_image.18} parent=0 // pred_fallthru
    _
  // Predicated region
  $region18: #{encode_image.18} parent=0 // pred_check
    _
  $region19: #{encode_image.18} parent=0 // pred_check_branch
    %19 = sbr.rel (0) target = $region21
  $region20: #{encode_image.18} parent=0 // pred_region
    _
  $region21: #{encode_image.18} parent=0 // pred_fallthru
    _
  %p21 = scmp.eq.s32.totalorder 0, 0
  // Predicated region
  $region22: #{encode_image.18} parent=0 // pred_check
    %p22 = pneg %p21
  $region23: #{encode_image.18} parent=0 // pred_check_branch
    %24 = sbr.rel (%p22) target = $region25
  $region24: #{encode_image.18} parent=0 // pred_region
    %v25 = vld [vmem:[%s0] sm:$0xff]
    %v26 = vld [vmem:[%s0 + $0x8] sm:$0xff]
    %vm27 = vcmask 261120
    %v28 = vsel %vm27, %v25, 0.0
    %29 = vadd.xlane.f32.xlu0 %v28
    %v30 = vpop.xlane.xlu0 %29
    %v31 = vsel %vm27, %v26, 0.0
    %32 = vadd.xlane.f32.xlu0 %v31
    %v33 = vpop.xlane.xlu0 %32
    %v34 = vrcp.pop 32.0
    %v35 = vmul.f32 %v30, %v34
    %v36 = vmul.f32 %v33, %v34
    %v37 = vsub.f32 %v25, %v35
    %v38 = vsub.f32 %v26, %v36
    %v39 = vmul.f32 %v37, %v37
    %v40 = vmul.f32 %v38, %v38
    %v41 = vsel %vm27, %v39, 0.0
    %42 = vadd.xlane.f32.xlu0 %v41
    %v43 = vpop.xlane.xlu0 %42
    %v44 = vsel %vm27, %v40, 0.0
    %45 = vadd.xlane.f32.xlu0 %v44
    %v46 = vpop.xlane.xlu0 %45
    %v47 = vmul.f32 %v43, %v34
    %v48 = vmul.f32 %v46, %v34
    %v49 = vadd.f32 %v47, 1e-05
    %v50 = vadd.f32 %v48, 1e-05
    %v51 = vrsqrt.pop %v49
    %v52 = vrsqrt.pop %v50
    %v53 = vmul.f32 %v37, %v51
    %v54 = vmul.f32 %v38, %v52
    %v55 = vld [vmem:[%s3] sm:$0x1]
    %v57 = vlaneseq
    %v58 = vshrl.u32 %v57, 7
    %v59 = vsub.s32 0, %v58
    %v60 = vrot.slane %v55, %v59
    %v62 = vmul.f32 %v53, %v60
    %v63 = vmul.f32 %v54, %v60
    %v64 = vld [vmem:[%s4] sm:$0x1]
    %v66 = vlaneseq
    %v67 = vshrl.u32 %v66, 7
    %v68 = vsub.s32 0, %v67
    %v69 = vrot.slane %v64, %v68
    %v71 = vadd.f32 %v62, %v69
    %v72 = vadd.f32 %v63, %v69
    %v73 = vpack.c.bf16 %v72, %v71
    %74 = vst.msk [vmem:[#allocation2] sm:$0xff] %vm27, %v73
  $region25: #{encode_image.18} parent=0 // pred_fallthru
    _
  %v75 = vld [vmem:[#allocation2] sm:$0xff]
  %v76 = vld [vmem:[%s1] sm:$0xf]
  %v77 = vld [vmem:[%s1 + $0x4] sm:$0xf]
  %v78 = vld [vmem:[%s1 + $0x8] sm:$0xf]
  %v79 = vld [vmem:[%s1 + $0xc] sm:$0xf]
  %v80 = vld [vmem:[%s2] sm:$0x1]
  %v82 = vlaneseq
  %v83 = vshrl.u32 %v82, 7
  %v84 = vsub.s32 0, %v83
  %v85 = vrot.slane %v80, %v84
  %v91 = vunpack.c.l.b16 %v76
  %v92 = vunpack.c.l.b16 %v77
  %v93 = vunpack.c.l.b16 %v78
  %v94 = vunpack.c.l.b16 %v79
  %v95 = vpack.c.b16 %v92, %v91
  %v96 = vpack.c.b16 %v94, %v93
  %vm99 = vcmask 261120
  %v101 = vsel %vm99, %v75, 0
  %103 = vmatprep.subr.bf16.mxu0 0
  %104 = vmatpush1.bf16.msra.mxu0 %v95
  %105 = vmatprep.subr.bf16.mxu0 0
  %106 = vmatpush1.bf16.msra.mxu0 %v96
  %107 = vmatprep.subr.bf16.mxu0 0
  %108 = vmatpush1.bf16.msra.mxu0 0
  %109 = vmatprep.subr.bf16.mxu0 0
  %110 = vmatpush1.bf16.msra.mxu0 0
  %111 = vmatprep.subr.bf16.mxu0 0
  %112 = vmatpush1.bf16.msra.mxu0 0
  %113 = vmatprep.subr.bf16.mxu0 0
  %114 = vmatpush1.bf16.msra.mxu0 0
  %115 = vmatprep.subr.bf16.mxu0 0
  %116 = vmatpush1.bf16.msra.mxu0 0
  %117 = vmatprep.subr.bf16.mxu0 0
  %118 = vmatpush1.bf16.msra.mxu0 0
  %119 = vmatprep.subr.bf16.mxu0 0
  %120 = vmatpush1.bf16.msra.mxu0 0
  %121 = vmatprep.subr.bf16.mxu0 0
  %122 = vmatpush1.bf16.msra.mxu0 0
  %123 = vmatprep.subr.bf16.mxu0 0
  %124 = vmatpush1.bf16.msra.mxu0 0
  %125 = vmatprep.subr.bf16.mxu0 0
  %126 = vmatpush1.bf16.msra.mxu0 0
  %127 = vmatprep.subr.bf16.mxu0 0
  %128 = vmatpush1.bf16.msra.mxu0 0
  %129 = vmatprep.subr.bf16.mxu0 0
  %130 = vmatpush1.bf16.msra.mxu0 0
  %131 = vmatprep.subr.bf16.mxu0 0
  %132 = vmatpush1.bf16.msra.mxu0 0
  %133 = vmatprep.subr.bf16.mxu0 0
  %134 = vmatpush1.bf16.msra.mxu0 0
  %135 = vmatprep.mubr.bf16.mxu0 0
  %136 = vmatmul.mubr.bf16.gmra.mrb[0].mxu0 %v101
  %v137 = vpop.f32.mrb[0].mxu0
  %v138 = vadd.f32 %v85, %v137
  %v139 = vpop.f32.mrb[0].mxu0
  %v140 = vpop.f32.mrb[0].mxu0
  %v141 = vadd.f32 %v85, %v140
  %v142 = vpop.f32.mrb[0].mxu0
  %143 = vdwg.mxu0
  %v144 = vmul.f32 %v138, 1.702
  %v145 = vmul.f32 %v141, 1.702
  %v146 = vxor.u32 %v144, 2147483648
  %v147 = vxor.u32 %v145, 2147483648
  %v148 = vmul.f32 %v146, 1.442695
  %v149 = vpow.pop %v148
  %v150 = vmul.f32 %v147, 1.442695
  %v151 = vpow.pop %v150
  %v152 = vadd.f32 %v149, 1.0
  %v153 = vadd.f32 %v151, 1.0
  %v154 = vrcp.pop %v152
  %v155 = vmul.f32 1.0, %v154
  %v156 = vrcp.pop %v153
  %v157 = vmul.f32 1.0, %v156
  %v158 = vmul.f32 %v138, %v155
  %v159 = vmul.f32 %v141, %v157
  %v160 = vpack.c.bf16 %v159, %v158
  %v162 = vunpack.c.l.b16 %v160
  %v163 = vunpack.c.h.b16 %v160
  %v164 = vpack.c.b16 %v162, %v162
  %v165 = vpack.c.b16 %v163, %v163
  %168 = vst [vmem:[%s5] sm:$0xf] %v164
  %169 = vst [vmem:[%s5 + $0x4] sm:$0xf] %v165
  // Predicated region
  $region26: #{encode_image.18} parent=0 // pred_check
    _
  $region27: #{encode_image.18} parent=0 // pred_check_branch
    %171 = sbr.rel (0) target = $region29
  $region28: #{encode_image.18} parent=0 // pred_region
    _
  $region29: #{encode_image.18} parent=0 // pred_fallthru
    _
  // Predicated region
  $region30: #{encode_image.18} parent=0 // pred_check
    _
  $region31: #{encode_image.18} parent=0 // pred_check_branch
    %173 = sbr.rel (0) target = $region33
  $region32: #{encode_image.18} parent=0 // pred_region
    _
  $region33: #{encode_image.18} parent=0 // pred_fallthru
    _

// kernel: encode_image.19
$region0: #{encode_image.19}
  #allocation0 [shape = 'u32[]', space=smem, size = 0x4, offset = 0x4, fixed_abs, tag = 'smem constant byte address 0x4 - core index']
  #allocation1 [shape = 'u32[144,128]{1,0:T(1,128)}', space=vmem, size = 0x12000, scoped, tag = 'internal scratch']
  %s0 = inlined_call_operand.vmem [shape: bf16[16,128], index: 0, kind: input, shape index: {}]
  %s1 = inlined_call_operand.vmem [shape: bf16[128,32], index: 1, kind: input, shape index: {}]
  %s2 = inlined_call_operand.vmem [shape: f32[1,32], index: 2, kind: input, shape index: {}]
  %s3 = inlined_call_operand.vmem [shape: f32[16,32], index: 3, kind: input, shape index: {}]
  %s4 = inlined_call_operand.vmem [shape: f32[16,32], index: 4, kind: output, shape index: {}]
  %s5 = sld [smem:[#allocation0]]
  $region26: #{encode_image.19} parent=0
    _
  %s7 = ssub.s32 1, %s5
  %s8 = scalar_select 0, %s7, %s5
  // Predicated region
  $region2: #{encode_image.19} parent=0 // pred_check
    _
  $region3: #{encode_image.19} parent=0 // pred_check_branch
    %10 = sbr.rel (0) target = $region5
  $region4: #{encode_image.19} parent=0 // pred_region
    _
  $region5: #{encode_image.19} parent=0 // pred_fallthru
    _
  // Predicated region
  $region6: #{encode_image.19} parent=0 // pred_check
    _
  $region7: #{encode_image.19} parent=0 // pred_check_branch
    %12 = sbr.rel (0) target = $region9
  $region8: #{encode_image.19} parent=0 // pred_region
    _
  $region9: #{encode_image.19} parent=0 // pred_fallthru
    _
  // Predicated region
  $region10: #{encode_image.19} parent=0 // pred_check
    _
  $region11: #{encode_image.19} parent=0 // pred_check_branch
    %14 = sbr.rel (0) target = $region13
  $region12: #{encode_image.19} parent=0 // pred_region
    _
  $region13: #{encode_image.19} parent=0 // pred_fallthru
    _
  // Predicated region
  $region14: #{encode_image.19} parent=0 // pred_check
    _
  $region15: #{encode_image.19} parent=0 // pred_check_branch
    %16 = sbr.rel (0) target = $region17
  $region16: #{encode_image.19} parent=0 // pred_region
    _
  $region17: #{encode_image.19} parent=0 // pred_fallthru
    _
  %v18 = vld [vmem:[%s0] sm:$0xf]
  %v19 = vld [vmem:[%s0 + $0x4] sm:$0xf]
  %v20 = vld [vmem:[%s1] sm:$0xf]
  %v21 = vld [vmem:[%s1 + $0x4] sm:$0xf]
  %v22 = vld [vmem:[%s1 + $0x8] sm:$0xf]
  %v23 = vld [vmem:[%s1 + $0xc] sm:$0xf]
  %v24 = vld [vmem:[%s1 + $0x10] sm:$0xf]
  %v25 = vld [vmem:[%s1 + $0x14] sm:$0xf]
  %v26 = vld [vmem:[%s1 + $0x18] sm:$0xf]
  %v27 = vld [vmem:[%s1 + $0x1c] sm:$0xf]
  %v28 = vld [vmem:[%s1 + $0x20] sm:$0xf]
  %v29 = vld [vmem:[%s1 + $0x24] sm:$0xf]
  %v30 = vld [vmem:[%s1 + $0x28] sm:$0xf]
  %v31 = vld [vmem:[%s1 + $0x2c] sm:$0xf]
  %v32 = vld [vmem:[%s1 + $0x30] sm:$0xf]
  %v33 = vld [vmem:[%s1 + $0x34] sm:$0xf]
  %v34 = vld [vmem:[%s1 + $0x38] sm:$0xf]
  %v35 = vld [vmem:[%s1 + $0x3c] sm:$0xf]
  %v36 = vld [vmem:[%s2] sm:$0x1]
  %v38 = vlaneseq
  %v39 = vshrl.u32 %v38, 7
  %v40 = vsub.s32 0, %v39
  %v41 = vrot.slane %v36, %v40
  %v45 = vunpack.c.l.b16 %v18
  %v46 = vunpack.c.l.b16 %v19
  %v47 = vpack.c.b16 %v46, %v45
  %v65 = vunpack.c.l.b16 %v20
  %v66 = vunpack.c.l.b16 %v21
  %v67 = vunpack.c.l.b16 %v22
  %v68 = vunpack.c.l.b16 %v23
  %v69 = vunpack.c.l.b16 %v24
  %v70 = vunpack.c.l.b16 %v25
  %v71 = vunpack.c.l.b16 %v26
  %v72 = vunpack.c.l.b16 %v27
  %v73 = vunpack.c.l.b16 %v28
  %v74 = vunpack.c.l.b16 %v29
  %v75 = vunpack.c.l.b16 %v30
  %v76 = vunpack.c.l.b16 %v31
  %v77 = vunpack.c.l.b16 %v32
  %v78 = vunpack.c.l.b16 %v33
  %v79 = vunpack.c.l.b16 %v34
  %v80 = vunpack.c.l.b16 %v35
  %v81 = vpack.c.b16 %v66, %v65
  %v82 = vpack.c.b16 %v68, %v67
  %v83 = vpack.c.b16 %v70, %v69
  %v84 = vpack.c.b16 %v72, %v71
  %v85 = vpack.c.b16 %v74, %v73
  %v86 = vpack.c.b16 %v76, %v75
  %v87 = vpack.c.b16 %v78, %v77
  %v88 = vpack.c.b16 %v80, %v79
  %97 = vmatprep.subr.bf16.mxu0 0
  %98 = vmatpush1.bf16.msra.mxu0 %v81
  %99 = vmatprep.subr.bf16.mxu0 0
  %100 = vmatpush1.bf16.msra.mxu0 %v82
  %101 = vmatprep.subr.bf16.mxu0 0
  %102 = vmatpush1.bf16.msra.mxu0 %v83
  %103 = vmatprep.subr.bf16.mxu0 0
  %104 = vmatpush1.bf16.msra.mxu0 %v84
  %105 = vmatprep.subr.bf16.mxu0 0
  %106 = vmatpush1.bf16.msra.mxu0 %v85
  %107 = vmatprep.subr.bf16.mxu0 0
  %108 = vmatpush1.bf16.msra.mxu0 %v86
  %109 = vmatprep.subr.bf16.mxu0 0
  %110 = vmatpush1.bf16.msra.mxu0 %v87
  %111 = vmatprep.subr.bf16.mxu0 0
  %112 = vmatpush1.bf16.msra.mxu0 %v88
  %113 = vmatprep.subr.bf16.mxu0 0
  %114 = vmatpush1.bf16.msra.mxu0 0
  %115 = vmatprep.subr.bf16.mxu0 0
  %116 = vmatpush1.bf16.msra.mxu0 0
  %117 = vmatprep.subr.bf16.mxu0 0
  %118 = vmatpush1.bf16.msra.mxu0 0
  %119 = vmatprep.subr.bf16.mxu0 0
  %120 = vmatpush1.bf16.msra.mxu0 0
  %121 = vmatprep.subr.bf16.mxu0 0
  %122 = vmatpush1.bf16.msra.mxu0 0
  %123 = vmatprep.subr.bf16.mxu0 0
  %124 = vmatpush1.bf16.msra.mxu0 0
  %125 = vmatprep.subr.bf16.mxu0 0
  %126 = vmatpush1.bf16.msra.mxu0 0
  %127 = vmatprep.subr.bf16.mxu0 0
  %128 = vmatpush1.bf16.msra.mxu0 0
  %129 = vmatprep.mubr.bf16.mxu0 0
  %130 = vmatmul.mubr.bf16.gmra.mrb[0].mxu0 %v47
  %v131 = vpop.f32.mrb[0].mxu0
  %v132 = vadd.f32 %v41, %v131
  %v133 = vpop.f32.mrb[0].mxu0
  %v134 = vpop.f32.mrb[0].mxu0
  %v135 = vadd.f32 %v41, %v134
  %v136 = vpop.f32.mrb[0].mxu0
  %137 = vdwg.mxu0
  %v138 = vld [vmem:[%s3] sm:$0xff]
  %v139 = vld [vmem:[%s3 + $0x8] sm:$0xff]
  %v140 = vadd.f32 %v132, %v138
  %v141 = vadd.f32 %v135, %v139
  %vm142 = vcmask 261120
  %143 = vst.msk [vmem:[%s4] sm:$0xff] %vm142, %v140
  %144 = vst.msk [vmem:[%s4 + $0x8] sm:$0xff] %vm142, %v141
  // Predicated region
  $region18: #{encode_image.19} parent=0 // pred_check
    _
  $region19: #{encode_image.19} parent=0 // pred_check_branch
    %146 = sbr.rel (0) target = $region21
  $region20: #{encode_image.19} parent=0 // pred_region
    _
  $region21: #{encode_image.19} parent=0 // pred_fallthru
    _
  // Predicated region
  $region22: #{encode_image.19} parent=0 // pred_check
    _
  $region23: #{encode_image.19} parent=0 // pred_check_branch
    %148 = sbr.rel (0) target = $region25
  $region24: #{encode_image.19} parent=0 // pred_region
    _
  $region25: #{encode_image.19} parent=0 // pred_fallthru
    _

// kernel: encode_image.25
$region0: #{encode_image.25}
  #allocation0 [shape = 'u32[]', space=smem, size = 0x4, offset = 0x4, fixed_abs, tag = 'smem constant byte address 0x4 - core index']
  #allocation1 [shape = 'u32[144,128]{1,0:T(1,128)}', space=vmem, size = 0x12000, scoped, tag = 'internal scratch']
  #allocation2 [shape = 'bf16[8,32]{1,0:T(8,128)(2,1)}', space=vmem, size = 0x800, scoped, tag = 'scratch operand']
  %s0 = inlined_call_operand.vmem [shape: f32[8,32], index: 0, kind: input, shape index: {}]
  %s1 = inlined_call_operand.vmem [shape: bf16[32,16], index: 1, kind: input, shape index: {}]
  %s2 = inlined_call_operand.vmem [shape: f32[1,16], index: 2, kind: input, shape index: {}]
  %s3 = inlined_call_operand.vmem [shape: f32[1,32], index: 3, kind: input, shape index: {}]
  %s4 = inlined_call_operand.vmem [shape: f32[1,32], index: 4, kind: input, shape index: {}]
  %s5 = inlined_call_operand.vmem [shape: f32[8,16], index: 5, kind: output, shape index: {}]
  %s6 = sld [smem:[#allocation0]]
  $region34: #{encode_image.25} parent=0
    _
  %s8 = ssub.s32 1, %s6
  %s9 = scalar_select 0, %s8, %s6
  // Predicated region
  $region2: #{encode_image.25} parent=0 // pred_check
    _
  $region3: #{encode_image.25} parent=0 // pred_check_branch
    %11 = sbr.rel (0) target = $region5
  $region4: #{encode_image.25} parent=0 // pred_region
    _
  $region5: #{encode_image.25} parent=0 // pred_fallthru
    _
  // Predicated region
  $region6: #{encode_image.25} parent=0 // pred_check
    _
  $region7: #{encode_image.25} parent=0 // pred_check_branch
    %13 = sbr.rel (0) target = $region9
  $region8: #{encode_image.25} parent=0 // pred_region
    _
  $region9: #{encode_image.25} parent=0 // pred_fallthru
    _
  // Predicated region
  $region10: #{encode_image.25} parent=0 // pred_check
    _
  $region11: #{encode_image.25} parent=0 // pred_check_branch
    %15 = sbr.rel (0) target = $region13
  $region12: #{encode_image.25} parent=0 // pred_region
    _
  $region13: #{encode_image.25} parent=0 // pred_fallthru
    _
  // Predicated region
  $region14: #{encode_image.25} parent=0 // pred_check
    _
  $region15: #{encode_image.25} parent=0 // pred_check_branch
    %17 = sbr.rel (0) target = $region17
  $region16: #{encode_image.25} parent=0 // pred_region
    _
  $region17: #{encode_image.25} parent=0 // pred_fallthru
    _
  // Predicated region
  $region18: #{encode_image.25} parent=0 // pred_check
    _
  $region19: #{encode_image.25} parent=0 // pred_check_branch
    %19 = sbr.rel (0) target = $region21
  $region20: #{encode_image.25} parent=0 // pred_region
    _
  $region21: #{encode_image.25} parent=0 // pred_fallthru
    _
  %p21 = scmp.eq.s32.totalorder 0, 0
  // Predicated region
  $region22: #{encode_image.25} parent=0 // pred_check
    %p22 = pneg %p21
  $region23: #{encode_image.25} parent=0 // pred_check_branch
    %24 = sbr.rel (%p22) target = $region25
  $region24: #{encode_image.25} parent=0 // pred_region
    %v25 = vld [vmem:[%s0] sm:$0xff]
    %vm26 = vcmask 261120
    %v27 = vsel %vm26, %v25, 0.0
    %28 = vadd.xlane.f32.xlu0 %v27
    %v29 = vpop.xlane.xlu0 %28
    %v30 = vrcp.pop 32.0
    %v31 = vmul.f32 %v29, %v30
    %v32 = vsub.f32 %v25, %v31
    %v33 = vmul.f32 %v32, %v32
    %v34 = vsel %vm26, %v33, 0.0
    %35 = vadd.xlane.f32.xlu0 %v34
    %v36 = vpop.xlane.xlu0 %35
    %v37 = vmul.f32 %v36, %v30
    %v38 = vadd.f32 %v37, 1e-05
    %v39 = vrsqrt.pop %v38
    %v40 = vmul.f32 %v32, %v39
    %v41 = vld [vmem:[%s3] sm:$0x1]
    %v43 = vlaneseq
    %v44 = vshrl.u32 %v43, 7
    %v45 = vsub.s32 0, %v44
    %v46 = vrot.slane %v41, %v45
    %v48 = vmul.f32 %v40, %v46
    %v49 = vld [vmem:[%s4] sm:$0x1]
    %v51 = vlaneseq
    %v52 = vshrl.u32 %v51, 7
    %v53 = vsub.s32 0, %v52
    %v54 = vrot.slane %v49, %v53
    %v56 = vadd.f32 %v48, %v54
    %v57 = vpack.c.bf16 %v56, %v56
    %vm58 = vcmask 257024
    %59 = vst.msk [vmem:[#allocation2] sm:$0xf] %vm58, %v57
  $region25: #{encode_image.25} parent=0 // pred_fallthru
    _
  %v60 = vld [vmem:[#allocation2] sm:$0xf]
  %v61 = vld [vmem:[%s1] sm:$0xf]
  %v62 = vld [vmem:[%s1 + $0x4] sm:$0xf]
  %v63 = vld [vmem:[%s1 + $0x8] sm:$0xf]
  %v64 = vld [vmem:[%s1 + $0xc] sm:$0xf]
  %v65 = vld [vmem:[%s2] sm:$0x1]
  %v67 = vlaneseq
  %v68 = vshrl.u32 %v67, 7
  %v69 = vsub.s32 0, %v68
  %v70 = vrot.slane %v65, %v69
  %v76 = vunpack.c.l.b16 %v61
  %v77 = vunpack.c.l.b16 %v62
  %v78 = vunpack.c.l.b16 %v63
  %v79 = vunpack.c.l.b16 %v64
  %v80 = vpack.c.b16 %v77, %v76
  %v81 = vpack.c.b16 %v79, %v78
  %vm84 = vcmask 261120
  %v86 = vsel %vm84, %v60, 0
  %88 = vmatprep.subr.bf16.mxu0 0
  %89 = vmatpush1.bf16.msra.mxu0 %v80
  %90 = vmatprep.subr.bf16.mxu0 0
  %91 = vmatpush1.bf16.msra.mxu0 %v81
  %92 = vmatprep.subr.bf16.mxu0 0
  %93 = vmatpush1.bf16.msra.mxu0 0
  %94 = vmatprep.subr.bf16.mxu0 0
  %95 = vmatpush1.bf16.msra.mxu0 0
  %96 = vmatprep.subr.bf16.mxu0 0
  %97 = vmatpush1.bf16.msra.mxu0 0
  %98 = vmatprep.subr.bf16.mxu0 0
  %99 = vmatpush1.bf16.msra.mxu0 0
  %100 = vmatprep.subr.bf16.mxu0 0
  %101 = vmatpush1.bf16.msra.mxu0 0
  %102 = vmatprep.subr.bf16.mxu0 0
  %103 = vmatpush1.bf16.msra.mxu0 0
  %104 = vmatprep.subr.bf16.mxu0 0
  %105 = vmatpush1.bf16.msra.mxu0 0
  %106 = vmatprep.subr.bf16.mxu0 0
  %107 = vmatpush1.bf16.msra.mxu0 0
  %108 = vmatprep.subr.bf16.mxu0 0
  %109 = vmatpush1.bf16.msra.mxu0 0
  %110 = vmatprep.subr.bf16.mxu0 0
  %111 = vmatpush1.bf16.msra.mxu0 0
  %112 = vmatprep.subr.bf16.mxu0 0
  %113 = vmatpush1.bf16.msra.mxu0 0
  %114 = vmatprep.subr.bf16.mxu0 0
  %115 = vmatpush1.bf16.msra.mxu0 0
  %116 = vmatprep.subr.bf16.mxu0 0
  %117 = vmatpush1.bf16.msra.mxu0 0
  %118 = vmatprep.subr.bf16.mxu0 0
  %119 = vmatpush1.bf16.msra.mxu0 0
  %120 = vmatprep.mubr.bf16.mxu0 0
  %121 = vmatmul.mubr.bf16.gmra.mrb[0].mxu0 %v86
  %v122 = vpop.f32.mrb[0].mxu0
  %v123 = vadd.f32 %v70, %v122
  %v124 = vpop.f32.mrb[0].mxu0
  %v125 = vpop.f32.mrb[0].mxu0
  %v126 = vpop.f32.mrb[0].mxu0
  %127 = vdwg.mxu0
  %vm128 = vcmask 130048
  %129 = vst.msk [vmem:[%s5] sm:$0xff] %vm128, %v123
  // Predicated region
  $region26: #{encode_image.25} parent=0 // pred_check
    _
  $region27: #{encode_image.25} parent=0 // pred_check_branch
    %131 = sbr.rel (0) target = $region29
  $region28: #{encode_image.25} parent=0 // pred_region
    _
  $region29: #{encode_image.25} parent=0 // pred_fallthru
    _
  // Predicated region
  $region30: #{encode_image.25} parent=0 // pred_check
    _
  $region31: #{encode_image.25} parent=0 // pred_check_branch
    %133 = sbr.rel (0) target = $region33
  $region32: #{encode_image.25} parent=0 // pred_region
    _
  $region33: #{encode_image.25} parent=0 // pred_fallthru
    _

</llo_original>
